<compile_context>
chip_gen: v6e
topology: v6e:2x2x1
jax: 0.10.0
libtpu: 0.0.40
codegen_flags: <defaults>
</compile_context>

<pallas_src>
import functools

import jax
import jax.numpy as jnp
from jax.experimental import pallas as pl
from jax.experimental.pallas import tpu as pltpu


# ----------------------------------------------------------------------------
# Fused kernel: embedding (step 0) + per-timestep (scale-1) eiconvIN layers +
# eiconvOUT layer + rain head, with h carried across grid steps in VMEM.
# ----------------------------------------------------------------------------
def _fused_kernel(x_ref, w_emb_ref, ef_ref, rain_ref, S_ref, D_ref,
                  wsrc_ref, wdst_ref, wef0_ref, wefr_ref,
                  wop_ref, wof_ref, woh_ref, worain_ref, wout_ref,
                  rain_all_ref, hr_ref, *, scale):
    l = pl.program_id(0)
    hdim = w_emb_ref.shape[1]

    # ---- first timestep: fused embedding + clear the resident rain output.
    @pl.when(l == 0)
    def _():
        hr_ref[:, :hdim] = jnp.dot(x_ref[...].astype(jnp.bfloat16),
                                   w_emb_ref[...],
                                   preferred_element_type=jnp.float32)
        rain_all_ref[...] = jnp.zeros_like(rain_all_ref)

    rain = rain_ref[0]                              # [N, 1] f32 (this step)
    hr_ref[:, hdim:hdim + 1] = rain                 # carry slot is [h | rain]
    hr = hr_ref[...].astype(jnp.bfloat16)           # [N, H+1]

    ef = ef_ref[0]                                  # [E, De] f32 (this step)
    S = S_ref[...]                                  # [E, N]  bf16 one-hot src
    D = D_ref[...]                                  # [E, N]  bf16 one-hot dst

    # ---- gather node features + rain onto edges (one-hot matmuls on MXU)
    src_f = jnp.dot(S, hr, preferred_element_type=jnp.float32)  # [E,H+1]=[h_src|rain_src]
    dst_f = jnp.dot(D, hr, preferred_element_type=jnp.float32)  # [E,H+1]=[h_dst|rain_dst]
    src_b = src_f.astype(jnp.bfloat16)
    dst_b = dst_f.astype(jnp.bfloat16)
    ef_b = ef.astype(jnp.bfloat16)

    # ---- eiconvIN layers (out_on=False): edge-feature propagation.
    # wsrc_ref[s] is [Wsrc[s]; wrain[s]] and wdst_ref[s] is [Wdst[s]; 0], so the
    # rain term rides along inside the src/dst matmuls. The first layer uses
    # Wef[0] with the `repeat(1, num_filters)` tiling pre-folded (exact).
    e = jnp.maximum(
        jnp.dot(src_b, wsrc_ref[0], preferred_element_type=jnp.float32)
        + jnp.dot(dst_b, wdst_ref[0], preferred_element_type=jnp.float32)
        + jnp.dot(ef_b, wef0_ref[...], preferred_element_type=jnp.float32),
        0.0)                                         # activation_edge = ReLU
    for s in range(1, scale - 1):
        e = jnp.maximum(
            jnp.dot(src_b, wsrc_ref[s], preferred_element_type=jnp.float32)
            + jnp.dot(dst_b, wdst_ref[s], preferred_element_type=jnp.float32)
            + jnp.dot(e.astype(jnp.bfloat16), wefr_ref[s - 1],
                      preferred_element_type=jnp.float32),
            0.0)

    # ---- eiconvOUT layer (out_on=True): edge message -> node aggregation.
    m = jnp.maximum(
        jnp.dot(e.astype(jnp.bfloat16), wop_ref[...],
                preferred_element_type=jnp.float32)
        + jnp.dot(ef_b, wof_ref[...], preferred_element_type=jnp.float32),
        0.0)                                          # [E, H]
    # agg = D^T @ m  (contract the edge axis of D; DT is never materialized)
    agg = jax.lax.dot_general(
        D, m.astype(jnp.bfloat16),
        dimension_numbers=(((0,), (0,)), ((), ())),
        preferred_element_type=jnp.float32)           # [N, H]
    h_new = jnp.tanh(
        jnp.dot(agg.astype(jnp.bfloat16), woh_ref[...],
                preferred_element_type=jnp.float32)
        + rain * worain_ref[...])                     # [N, H]  activation_o
    hr_ref[:, :hdim] = h_new                          # carry to next timestep

    # ---- rain head, deposited into column l of the resident output.
    rain_col = jnp.dot(h_new.astype(jnp.bfloat16), wout_ref[...],
                       preferred_element_type=jnp.float32)       # [N, 1]
    col = jax.lax.broadcasted_iota(jnp.int32, rain_all_ref.shape, 1)
    rain_all_ref[...] = jnp.where(
        col == l,
        jnp.broadcast_to(rain_col, rain_all_ref.shape),
        rain_all_ref[...])


# ----------------------------------------------------------------------------
# Full forward (matches STEIConvNetMScaleCompactPROP.forward)
# ----------------------------------------------------------------------------
def steiconv_forward(x, e_feats, rain0, src, dst, params,
                     *, scale, num_layers, num_filters):
    assert scale >= 2, "module always invokes eiconvIN_layers[0]"
    n, _ = x.shape
    e_cnt, edge_dim, _ = e_feats.shape
    hdim = params["W_emb"].shape[1]
    dec = edge_dim * num_filters

    bf = lambda a: a.astype(jnp.bfloat16)

    # one-hot incidence matrices (0/1 are exact in bf16); DT is not built.
    S = jax.nn.one_hot(src, n, dtype=jnp.bfloat16)            # [E, N]
    D = jax.nn.one_hot(dst, n, dtype=jnp.bfloat16)            # [E, N]

    # layer-major views so the temporal grid axis indexes them directly.
    ef_all = jnp.transpose(e_feats, (2, 0, 1))                # [L, E, De]
    rain_in = jnp.transpose(rain0, (1, 0))[:, :, None]        # [L, N, 1]

    # packed weights:
    #   [h_src | rain_src] @ [Wsrc[s]; wrain[s]]  +  [h_dst | rain_dst] @ [Wdst[s]; 0]
    wsrc_p = jnp.concatenate(
        [params["Wsrc"], params["wrain"][:, None, :]], axis=1)   # [S-1, H+1, dec]
    wdst_p = jnp.concatenate(
        [params["Wdst"], jnp.zeros_like(params["wrain"])[:, None, :]],
        axis=1)                                                  # [S-1, H+1, dec]
    # fold the efeat `repeat(1, num_filters)` of the first IN layer into Wef[0]
    wef0 = params["Wef"][0].reshape(num_filters, edge_dim, dec).sum(axis=0)
    wefr = (params["Wef"][1:] if scale > 2
            else jnp.zeros((1, dec, dec), params["Wef"].dtype))

    ins = (x, bf(params["W_emb"]), ef_all, rain_in, S, D,
           bf(wsrc_p), bf(wdst_p), bf(wef0), bf(wefr),
           bf(params["Wop"]), bf(params["Wof"]), bf(params["Woh"]),
           params["worain"].astype(jnp.float32), bf(params["wout"]))

    def const_spec(shape):
        nd = len(shape)
        return pl.BlockSpec(shape, lambda l, _n=nd: (0,) * _n)

    in_specs = [
        const_spec(ins[0].shape),                                  # x
        const_spec(ins[1].shape),                                  # W_emb
        pl.BlockSpec((1, e_cnt, edge_dim), lambda l: (l, 0, 0)),   # e_feats[l]
        pl.BlockSpec((1, n, 1), lambda l: (l, 0, 0)),              # rain0[:, l]
        const_spec(S.shape), const_spec(D.shape),
        const_spec(ins[6].shape), const_spec(ins[7].shape),
        const_spec(ins[8].shape), const_spec(ins[9].shape),
        const_spec(ins[10].shape), const_spec(ins[11].shape),
        const_spec(ins[12].shape), const_spec(ins[13].shape),
        const_spec(ins[14].shape),
    ]

    kern = functools.partial(_fused_kernel, scale=scale)
    return pl.pallas_call(
        kern,
        out_shape=jax.ShapeDtypeStruct((n, num_layers), jnp.float32),
        grid=(num_layers,),
        in_specs=in_specs,
        out_specs=pl.BlockSpec((n, num_layers), lambda l: (0, 0)),
        scratch_shapes=[pltpu.VMEM((n, hdim + 1), jnp.float32)],   # [h | rain]
        compiler_params=pltpu.CompilerParams(
            dimension_semantics=("arbitrary",)),
    )(*ins)


# ----------------------------------------------------------------------------
# Deterministic parameter construction (shapes implied by __init__)
# ----------------------------------------------------------------------------
def make_params(key, in_dim, num_hidden, edge_dim, num_filters, scale):
    dec = edge_dim * num_filters
    ks = jax.random.split(key, 10)

    def init(k, shape, fan_in):
        return jax.random.normal(k, shape, jnp.float32) / jnp.sqrt(fan_in)

    return {
        "W_emb":  init(ks[0], (in_dim, num_hidden), in_dim),
        "Wsrc":   init(ks[1], (scale - 1, num_hidden, dec), num_hidden),
        "Wdst":   init(ks[2], (scale - 1, num_hidden, dec), num_hidden),
        "Wef":    init(ks[3], (scale - 1, dec, dec), dec),
        "wrain":  init(ks[4], (scale - 1, dec), 1),
        "Wop":    init(ks[5], (dec, num_hidden), dec),
        "Wof":    init(ks[6], (edge_dim, num_hidden), edge_dim),
        "Woh":    init(ks[7], (num_hidden, num_hidden), num_hidden),
        "worain": init(ks[8], (1, num_hidden), 1),
        "wout":   init(ks[9], (num_hidden, 1), num_hidden),
    }


if __name__ == "__main__":
    # small, deterministic problem
    N, E = 16, 32                 # nodes, edges
    in_dim = 8
    num_hidden = 32
    edge_dim = 4
    num_filters = 2
    scale = 3                     # -> scale-1 = 2 eiconvIN layers
    num_layers = 4                # temporal steps / output columns

    key = jax.random.PRNGKey(0)
    k_x, k_e, k_r, k_src, k_dst, k_p = jax.random.split(key, 6)

    inputs = jax.random.normal(k_x, (N, in_dim), jnp.float32)
    e_feats = jax.random.normal(k_e, (E, edge_dim, num_layers), jnp.float32)
    rain0 = jax.random.normal(k_r, (N, num_layers), jnp.float32)
    src = jax.random.randint(k_src, (E,), 0, N)
    dst = jax.random.randint(k_dst, (E,), 0, N)

    params = make_params(k_p, in_dim, num_hidden, edge_dim, num_filters, scale)

    rain_all = steiconv_forward(
        inputs, e_feats, rain0, src, dst, params,
        scale=scale, num_layers=num_layers, num_filters=num_filters)
    rain_all = jax.block_until_ready(rain_all)

    assert rain_all.shape == (N, num_layers)
    assert rain_all.dtype == jnp.float32
    print("KERNEL_OK")
</pallas_src>

<mosaic_0001>
module attributes {stable_mosaic.version = 11 : i64} {
  func.func @_fused_kernel(%arg0: i32, %arg1: memref<16x8xf32, #tpu.memory_space<vmem>>, %arg2: memref<8x32xbf16, #tpu.memory_space<vmem>>, %arg3: memref<1x32x4xf32, #tpu.memory_space<vmem>>, %arg4: memref<1x16x1xf32, #tpu.memory_space<vmem>>, %arg5: memref<32x16xbf16, #tpu.memory_space<vmem>>, %arg6: memref<32x16xbf16, #tpu.memory_space<vmem>>, %arg7: memref<2x33x8xbf16, #tpu.memory_space<vmem>>, %arg8: memref<2x33x8xbf16, #tpu.memory_space<vmem>>, %arg9: memref<4x8xbf16, #tpu.memory_space<vmem>>, %arg10: memref<1x8x8xbf16, #tpu.memory_space<vmem>>, %arg11: memref<8x32xbf16, #tpu.memory_space<vmem>>, %arg12: memref<4x32xbf16, #tpu.memory_space<vmem>>, %arg13: memref<32x32xbf16, #tpu.memory_space<vmem>>, %arg14: memref<1x32xf32, #tpu.memory_space<vmem>>, %arg15: memref<32x1xbf16, #tpu.memory_space<vmem>>, %arg16: memref<16x4xf32, #tpu.memory_space<vmem>>, %arg17: memref<16x33xf32, #tpu.memory_space<vmem>>) attributes {dimension_semantics = [#tpu.dimension_semantics<arbitrary>], iteration_bounds = array<i64: 4>, scalar_prefetch = 0 : i64, scratch_operands = 1 : i64, tpu.core_type = #tpu.core_type<tc>, window_params = [{pipeline_mode = #tpu.pipeline_mode<synchronous>, transform_indices = @transform_0, window_bounds = array<i64: 16, 8>}, {pipeline_mode = #tpu.pipeline_mode<synchronous>, transform_indices = @transform_1, window_bounds = array<i64: 8, 32>}, {transform_indices = @transform_2, window_bounds = array<i64: 1, 32, 4>}, {transform_indices = @transform_3, window_bounds = array<i64: 1, 16, 1>}, {pipeline_mode = #tpu.pipeline_mode<synchronous>, transform_indices = @transform_4, window_bounds = array<i64: 32, 16>}, {pipeline_mode = #tpu.pipeline_mode<synchronous>, transform_indices = @transform_5, window_bounds = array<i64: 32, 16>}, {pipeline_mode = #tpu.pipeline_mode<synchronous>, transform_indices = @transform_6, window_bounds = array<i64: 2, 33, 8>}, {pipeline_mode = #tpu.pipeline_mode<synchronous>, transform_indices = @transform_7, window_bounds = array<i64: 2, 33, 8>}, {pipeline_mode = #tpu.pipeline_mode<synchronous>, transform_indices = @transform_8, window_bounds = array<i64: 4, 8>}, {pipeline_mode = #tpu.pipeline_mode<synchronous>, transform_indices = @transform_9, window_bounds = array<i64: 1, 8, 8>}, {pipeline_mode = #tpu.pipeline_mode<synchronous>, transform_indices = @transform_10, window_bounds = array<i64: 8, 32>}, {pipeline_mode = #tpu.pipeline_mode<synchronous>, transform_indices = @transform_11, window_bounds = array<i64: 4, 32>}, {pipeline_mode = #tpu.pipeline_mode<synchronous>, transform_indices = @transform_12, window_bounds = array<i64: 32, 32>}, {pipeline_mode = #tpu.pipeline_mode<synchronous>, transform_indices = @transform_13, window_bounds = array<i64: 1, 32>}, {pipeline_mode = #tpu.pipeline_mode<synchronous>, transform_indices = @transform_14, window_bounds = array<i64: 32, 1>}, {pipeline_mode = #tpu.pipeline_mode<synchronous>, transform_indices = @transform_15, window_bounds = array<i64: 16, 4>}]} {
    %c0_i32 = arith.constant 0 : i32
    %0 = arith.cmpi eq, %arg0, %c0_i32 : i32
    %1 = arith.extui %0 : i1 to i32
    %c0_i32_0 = arith.constant 0 : i32
    %2 = arith.cmpi ne, %1, %c0_i32_0 : i32
    scf.if %2 {
      %c0_60 = arith.constant 0 : index
      %c0_61 = arith.constant 0 : index
      %74 = vector.load %arg1[%c0_60, %c0_61] : memref<16x8xf32, #tpu.memory_space<vmem>>, vector<16x8xf32>
      %75 = arith.truncf %74 : vector<16x8xf32> to vector<16x8xbf16>
      %c0_62 = arith.constant 0 : index
      %c0_63 = arith.constant 0 : index
      %76 = vector.load %arg2[%c0_62, %c0_63] : memref<8x32xbf16, #tpu.memory_space<vmem>>, vector<8x32xbf16>
      %cst_64 = arith.constant dense<0.000000e+00> : vector<16x32xf32>
      %77 = tpu.matmul %75, %76, %cst_64 {dimension_numbers = #tpu.dot_dimension_numbers<[1], [0], [0], [1], [0, 0, 1, 1], [], []>} : vector<16x8xbf16>, vector<8x32xbf16>, vector<16x32xf32> -> vector<16x32xf32>
      %c0_65 = arith.constant 0 : index
      %c0_66 = arith.constant 0 : index
      %78 = vector.load %arg17[%c0_65, %c0_66] : memref<16x33xf32, #tpu.memory_space<vmem>>, vector<16x32xf32>
      tpu.vector_store %arg17[%c0_65, %c0_66], %77 {strides = array<i32>} : memref<16x33xf32, #tpu.memory_space<vmem>>, vector<16x32xf32>,
      %cst_67 = arith.constant 0.000000e+00 : f32
      %79 = vector.broadcast %cst_67 : f32 to vector<16x4xf32>
      %c0_68 = arith.constant 0 : index
      %c0_69 = arith.constant 0 : index
      %80 = vector.load %arg16[%c0_68, %c0_69] : memref<16x4xf32, #tpu.memory_space<vmem>>, vector<16x4xf32>
      tpu.vector_store %arg16[%c0_68, %c0_69], %79 {strides = array<i32>} : memref<16x4xf32, #tpu.memory_space<vmem>>, vector<16x4xf32>,
    } else {
    }
    %c0 = arith.constant 0 : index
    %c0_1 = arith.constant 0 : index
    %c0_2 = arith.constant 0 : index
    %3 = vector.load %arg4[%c0, %c0_1, %c0_2] : memref<1x16x1xf32, #tpu.memory_space<vmem>>, vector<1x16x1xf32>
    %4 = vector.shape_cast %3 : vector<1x16x1xf32> to vector<16x1xf32>
    %c0_3 = arith.constant 0 : index
    %c32 = arith.constant 32 : index
    %5 = vector.load %arg17[%c0_3, %c32] : memref<16x33xf32, #tpu.memory_space<vmem>>, vector<16x1xf32>
    tpu.vector_store %arg17[%c0_3, %c32], %4 {strides = array<i32>} : memref<16x33xf32, #tpu.memory_space<vmem>>, vector<16x1xf32>,
    %c0_4 = arith.constant 0 : index
    %c0_5 = arith.constant 0 : index
    %6 = vector.load %arg17[%c0_4, %c0_5] : memref<16x33xf32, #tpu.memory_space<vmem>>, vector<16x33xf32>
    %7 = arith.truncf %6 : vector<16x33xf32> to vector<16x33xbf16>
    %c0_6 = arith.constant 0 : index
    %c0_7 = arith.constant 0 : index
    %c0_8 = arith.constant 0 : index
    %8 = vector.load %arg3[%c0_6, %c0_7, %c0_8] : memref<1x32x4xf32, #tpu.memory_space<vmem>>, vector<1x32x4xf32>
    %9 = vector.shape_cast %8 : vector<1x32x4xf32> to vector<32x4xf32>
    %c0_9 = arith.constant 0 : index
    %c0_10 = arith.constant 0 : index
    %10 = vector.load %arg5[%c0_9, %c0_10] : memref<32x16xbf16, #tpu.memory_space<vmem>>, vector<32x16xbf16>
    %c0_11 = arith.constant 0 : index
    %c0_12 = arith.constant 0 : index
    %11 = vector.load %arg6[%c0_11, %c0_12] : memref<32x16xbf16, #tpu.memory_space<vmem>>, vector<32x16xbf16>
    %cst = arith.constant dense<0.000000e+00> : vector<32x33xf32>
    %12 = tpu.matmul %10, %7, %cst {dimension_numbers = #tpu.dot_dimension_numbers<[1], [0], [0], [1], [0, 0, 1, 1], [], []>} : vector<32x16xbf16>, vector<16x33xbf16>, vector<32x33xf32> -> vector<32x33xf32>
    %cst_13 = arith.constant dense<0.000000e+00> : vector<32x33xf32>
    %13 = tpu.matmul %11, %7, %cst_13 {dimension_numbers = #tpu.dot_dimension_numbers<[1], [0], [0], [1], [0, 0, 1, 1], [], []>} : vector<32x16xbf16>, vector<16x33xbf16>, vector<32x33xf32> -> vector<32x33xf32>
    %14 = arith.truncf %12 : vector<32x33xf32> to vector<32x33xbf16>
    %15 = arith.truncf %13 : vector<32x33xf32> to vector<32x33xbf16>
    %16 = arith.truncf %9 : vector<32x4xf32> to vector<32x4xbf16>
    %c0_14 = arith.constant 0 : index
    %c0_15 = arith.constant 0 : index
    %c0_16 = arith.constant 0 : index
    %17 = vector.load %arg7[%c0_14, %c0_15, %c0_16] : memref<2x33x8xbf16, #tpu.memory_space<vmem>>, vector<1x33x8xbf16>
    %18 = vector.shape_cast %17 : vector<1x33x8xbf16> to vector<33x8xbf16>
    %cst_17 = arith.constant dense<0.000000e+00> : vector<32x8xf32>
    %19 = tpu.matmul %14, %18, %cst_17 {dimension_numbers = #tpu.dot_dimension_numbers<[1], [0], [0], [1], [0, 0, 1, 1], [], []>} : vector<32x33xbf16>, vector<33x8xbf16>, vector<32x8xf32> -> vector<32x8xf32>
    %c0_18 = arith.constant 0 : index
    %c0_19 = arith.constant 0 : index
    %c0_20 = arith.constant 0 : index
    %20 = vector.load %arg8[%c0_18, %c0_19, %c0_20] : memref<2x33x8xbf16, #tpu.memory_space<vmem>>, vector<1x33x8xbf16>
    %21 = vector.shape_cast %20 : vector<1x33x8xbf16> to vector<33x8xbf16>
    %cst_21 = arith.constant dense<0.000000e+00> : vector<32x8xf32>
    %22 = tpu.matmul %15, %21, %cst_21 {dimension_numbers = #tpu.dot_dimension_numbers<[1], [0], [0], [1], [0, 0, 1, 1], [], []>} : vector<32x33xbf16>, vector<33x8xbf16>, vector<32x8xf32> -> vector<32x8xf32>
    %23 = arith.addf %19, %22 : vector<32x8xf32>
    %c0_22 = arith.constant 0 : index
    %c0_23 = arith.constant 0 : index
    %24 = vector.load %arg9[%c0_22, %c0_23] : memref<4x8xbf16, #tpu.memory_space<vmem>>, vector<4x8xbf16>
    %cst_24 = arith.constant dense<0.000000e+00> : vector<32x8xf32>
    %25 = tpu.matmul %16, %24, %cst_24 {dimension_numbers = #tpu.dot_dimension_numbers<[1], [0], [0], [1], [0, 0, 1, 1], [], []>} : vector<32x4xbf16>, vector<4x8xbf16>, vector<32x8xf32> -> vector<32x8xf32>
    %26 = arith.addf %23, %25 : vector<32x8xf32>
    %cst_25 = arith.constant 0.000000e+00 : f32
    %27 = vector.broadcast %cst_25 : f32 to vector<32x8xf32>
    %28 = arith.maximumf %26, %27 : vector<32x8xf32>
    %c1 = arith.constant 1 : index
    %c0_26 = arith.constant 0 : index
    %c0_27 = arith.constant 0 : index
    %29 = vector.load %arg7[%c1, %c0_26, %c0_27] : memref<2x33x8xbf16, #tpu.memory_space<vmem>>, vector<1x33x8xbf16>
    %30 = vector.shape_cast %29 : vector<1x33x8xbf16> to vector<33x8xbf16>
    %cst_28 = arith.constant dense<0.000000e+00> : vector<32x8xf32>
    %31 = tpu.matmul %14, %30, %cst_28 {dimension_numbers = #tpu.dot_dimension_numbers<[1], [0], [0], [1], [0, 0, 1, 1], [], []>} : vector<32x33xbf16>, vector<33x8xbf16>, vector<32x8xf32> -> vector<32x8xf32>
    %c1_29 = arith.constant 1 : index
    %c0_30 = arith.constant 0 : index
    %c0_31 = arith.constant 0 : index
    %32 = vector.load %arg8[%c1_29, %c0_30, %c0_31] : memref<2x33x8xbf16, #tpu.memory_space<vmem>>, vector<1x33x8xbf16>
    %33 = vector.shape_cast %32 : vector<1x33x8xbf16> to vector<33x8xbf16>
    %cst_32 = arith.constant dense<0.000000e+00> : vector<32x8xf32>
    %34 = tpu.matmul %15, %33, %cst_32 {dimension_numbers = #tpu.dot_dimension_numbers<[1], [0], [0], [1], [0, 0, 1, 1], [], []>} : vector<32x33xbf16>, vector<33x8xbf16>, vector<32x8xf32> -> vector<32x8xf32>
    %35 = arith.addf %31, %34 : vector<32x8xf32>
    %36 = arith.truncf %28 : vector<32x8xf32> to vector<32x8xbf16>
    %c0_33 = arith.constant 0 : index
    %c0_34 = arith.constant 0 : index
    %c0_35 = arith.constant 0 : index
    %37 = vector.load %arg10[%c0_33, %c0_34, %c0_35] : memref<1x8x8xbf16, #tpu.memory_space<vmem>>, vector<1x8x8xbf16>
    %38 = vector.shape_cast %37 : vector<1x8x8xbf16> to vector<8x8xbf16>
    %cst_36 = arith.constant dense<0.000000e+00> : vector<32x8xf32>
    %39 = tpu.matmul %36, %38, %cst_36 {dimension_numbers = #tpu.dot_dimension_numbers<[1], [0], [0], [1], [0, 0, 1, 1], [], []>} : vector<32x8xbf16>, vector<8x8xbf16>, vector<32x8xf32> -> vector<32x8xf32>
    %40 = arith.addf %35, %39 : vector<32x8xf32>
    %cst_37 = arith.constant 0.000000e+00 : f32
    %41 = vector.broadcast %cst_37 : f32 to vector<32x8xf32>
    %42 = arith.maximumf %40, %41 : vector<32x8xf32>
    %43 = arith.truncf %42 : vector<32x8xf32> to vector<32x8xbf16>
    %c0_38 = arith.constant 0 : index
    %c0_39 = arith.constant 0 : index
    %44 = vector.load %arg11[%c0_38, %c0_39] : memref<8x32xbf16, #tpu.memory_space<vmem>>, vector<8x32xbf16>
    %cst_40 = arith.constant dense<0.000000e+00> : vector<32x32xf32>
    %45 = tpu.matmul %43, %44, %cst_40 {dimension_numbers = #tpu.dot_dimension_numbers<[1], [0], [0], [1], [0, 0, 1, 1], [], []>} : vector<32x8xbf16>, vector<8x32xbf16>, vector<32x32xf32> -> vector<32x32xf32>
    %c0_41 = arith.constant 0 : index
    %c0_42 = arith.constant 0 : index
    %46 = vector.load %arg12[%c0_41, %c0_42] : memref<4x32xbf16, #tpu.memory_space<vmem>>, vector<4x32xbf16>
    %cst_43 = arith.constant dense<0.000000e+00> : vector<32x32xf32>
    %47 = tpu.matmul %16, %46, %cst_43 {dimension_numbers = #tpu.dot_dimension_numbers<[1], [0], [0], [1], [0, 0, 1, 1], [], []>} : vector<32x4xbf16>, vector<4x32xbf16>, vector<32x32xf32> -> vector<32x32xf32>
    %48 = arith.addf %45, %47 : vector<32x32xf32>
    %cst_44 = arith.constant 0.000000e+00 : f32
    %49 = vector.broadcast %cst_44 : f32 to vector<32x32xf32>
    %50 = arith.maximumf %48, %49 : vector<32x32xf32>
    %51 = arith.truncf %50 : vector<32x32xf32> to vector<32x32xbf16>
    %cst_45 = arith.constant dense<0.000000e+00> : vector<16x32xf32>
    %52 = tpu.matmul %11, %51, %cst_45 {dimension_numbers = #tpu.dot_dimension_numbers<[0], [0], [1], [1], [0, 1, 1, 1], [], []>} : vector<32x16xbf16>, vector<32x32xbf16>, vector<16x32xf32> -> vector<16x32xf32>
    %53 = arith.truncf %52 : vector<16x32xf32> to vector<16x32xbf16>
    %c0_46 = arith.constant 0 : index
    %c0_47 = arith.constant 0 : index
    %54 = vector.load %arg13[%c0_46, %c0_47] : memref<32x32xbf16, #tpu.memory_space<vmem>>, vector<32x32xbf16>
    %cst_48 = arith.constant dense<0.000000e+00> : vector<16x32xf32>
    %55 = tpu.matmul %53, %54, %cst_48 {dimension_numbers = #tpu.dot_dimension_numbers<[1], [0], [0], [1], [0, 0, 1, 1], [], []>} : vector<16x32xbf16>, vector<32x32xbf16>, vector<16x32xf32> -> vector<16x32xf32>
    %c0_49 = arith.constant 0 : index
    %c0_50 = arith.constant 0 : index
    %56 = vector.load %arg14[%c0_49, %c0_50] : memref<1x32xf32, #tpu.memory_space<vmem>>, vector<1x32xf32>
    %57 = vector.broadcast %4 : vector<16x1xf32> to vector<16x32xf32>
    %58 = vector.broadcast %56 : vector<1x32xf32> to vector<16x32xf32>
    %59 = arith.mulf %57, %58 : vector<16x32xf32>
    %60 = arith.addf %55, %59 : vector<16x32xf32>
    %61 = math.tanh %60 : vector<16x32xf32>
    %c0_51 = arith.constant 0 : index
    %c0_52 = arith.constant 0 : index
    %62 = vector.load %arg17[%c0_51, %c0_52] : memref<16x33xf32, #tpu.memory_space<vmem>>, vector<16x32xf32>
    tpu.vector_store %arg17[%c0_51, %c0_52], %61 {strides = array<i32>} : memref<16x33xf32, #tpu.memory_space<vmem>>, vector<16x32xf32>,
    %63 = arith.truncf %61 : vector<16x32xf32> to vector<16x32xbf16>
    %c0_53 = arith.constant 0 : index
    %c0_54 = arith.constant 0 : index
    %64 = vector.load %arg15[%c0_53, %c0_54] : memref<32x1xbf16, #tpu.memory_space<vmem>>, vector<32x1xbf16>
    %cst_55 = arith.constant dense<0.000000e+00> : vector<16x1xf32>
    %65 = tpu.matmul %63, %64, %cst_55 {dimension_numbers = #tpu.dot_dimension_numbers<[1], [0], [0], [1], [0, 0, 1, 1], [], []>} : vector<16x32xbf16>, vector<32x1xbf16>, vector<16x1xf32> -> vector<16x1xf32>
    %66 = tpu.iota {dimensions = array<i32: 1>} : vector<16x4xi32>
    %67 = vector.broadcast %arg0 : i32 to vector<16x4xi32>
    %68 = arith.cmpi eq, %66, %67 : vector<16x4xi32>
    %69 = vector.shape_cast %65 : vector<16x1xf32> to vector<16x1xf32>
    %70 = vector.broadcast %69 : vector<16x1xf32> to vector<16x4xf32>
    %c0_56 = arith.constant 0 : index
    %c0_57 = arith.constant 0 : index
    %71 = vector.load %arg16[%c0_56, %c0_57] : memref<16x4xf32, #tpu.memory_space<vmem>>, vector<16x4xf32>
    %72 = arith.select %68, %70, %71 : vector<16x4xi1>, vector<16x4xf32>
    %c0_58 = arith.constant 0 : index
    %c0_59 = arith.constant 0 : index
    %73 = vector.load %arg16[%c0_58, %c0_59] : memref<16x4xf32, #tpu.memory_space<vmem>>, vector<16x4xf32>
    tpu.vector_store %arg16[%c0_58, %c0_59], %72 {strides = array<i32>} : memref<16x4xf32, #tpu.memory_space<vmem>>, vector<16x4xf32>,
    return
  }
  func.func @transform_0(%arg0: i32) -> (i32, i32) {
    %c0_i32 = arith.constant 0 : i32
    %c0_i32_0 = arith.constant 0 : i32
    %c0_i32_1 = arith.constant 0 : i32
    return %c0_i32, %c0_i32_0 : i32, i32
  }
  func.func @transform_1(%arg0: i32) -> (i32, i32) {
    %c0_i32 = arith.constant 0 : i32
    %c0_i32_0 = arith.constant 0 : i32
    %c0_i32_1 = arith.constant 0 : i32
    return %c0_i32, %c0_i32_0 : i32, i32
  }
  func.func @transform_2(%arg0: i32) -> (i32, i32, i32) {
    %c0_i32 = arith.constant 0 : i32
    %c0_i32_0 = arith.constant 0 : i32
    %c0_i32_1 = arith.constant 0 : i32
    return %arg0, %c0_i32, %c0_i32_0 : i32, i32, i32
  }
  func.func @transform_3(%arg0: i32) -> (i32, i32, i32) {
    %c0_i32 = arith.constant 0 : i32
    %c0_i32_0 = arith.constant 0 : i32
    %c0_i32_1 = arith.constant 0 : i32
    return %arg0, %c0_i32, %c0_i32_0 : i32, i32, i32
  }
  func.func @transform_4(%arg0: i32) -> (i32, i32) {
    %c0_i32 = arith.constant 0 : i32
    %c0_i32_0 = arith.constant 0 : i32
    %c0_i32_1 = arith.constant 0 : i32
    return %c0_i32, %c0_i32_0 : i32, i32
  }
  func.func @transform_5(%arg0: i32) -> (i32, i32) {
    %c0_i32 = arith.constant 0 : i32
    %c0_i32_0 = arith.constant 0 : i32
    %c0_i32_1 = arith.constant 0 : i32
    return %c0_i32, %c0_i32_0 : i32, i32
  }
  func.func @transform_6(%arg0: i32) -> (i32, i32, i32) {
    %c0_i32 = arith.constant 0 : i32
    %c0_i32_0 = arith.constant 0 : i32
    %c0_i32_1 = arith.constant 0 : i32
    %c0_i32_2 = arith.constant 0 : i32
    return %c0_i32, %c0_i32_0, %c0_i32_1 : i32, i32, i32
  }
  func.func @transform_7(%arg0: i32) -> (i32, i32, i32) {
    %c0_i32 = arith.constant 0 : i32
    %c0_i32_0 = arith.constant 0 : i32
    %c0_i32_1 = arith.constant 0 : i32
    %c0_i32_2 = arith.constant 0 : i32
    return %c0_i32, %c0_i32_0, %c0_i32_1 : i32, i32, i32
  }
  func.func @transform_8(%arg0: i32) -> (i32, i32) {
    %c0_i32 = arith.constant 0 : i32
    %c0_i32_0 = arith.constant 0 : i32
    %c0_i32_1 = arith.constant 0 : i32
    return %c0_i32, %c0_i32_0 : i32, i32
  }
  func.func @transform_9(%arg0: i32) -> (i32, i32, i32) {
    %c0_i32 = arith.constant 0 : i32
    %c0_i32_0 = arith.constant 0 : i32
    %c0_i32_1 = arith.constant 0 : i32
    %c0_i32_2 = arith.constant 0 : i32
    return %c0_i32, %c0_i32_0, %c0_i32_1 : i32, i32, i32
  }
  func.func @transform_10(%arg0: i32) -> (i32, i32) {
    %c0_i32 = arith.constant 0 : i32
    %c0_i32_0 = arith.constant 0 : i32
    %c0_i32_1 = arith.constant 0 : i32
    return %c0_i32, %c0_i32_0 : i32, i32
  }
  func.func @transform_11(%arg0: i32) -> (i32, i32) {
    %c0_i32 = arith.constant 0 : i32
    %c0_i32_0 = arith.constant 0 : i32
    %c0_i32_1 = arith.constant 0 : i32
    return %c0_i32, %c0_i32_0 : i32, i32
  }
  func.func @transform_12(%arg0: i32) -> (i32, i32) {
    %c0_i32 = arith.constant 0 : i32
    %c0_i32_0 = arith.constant 0 : i32
    %c0_i32_1 = arith.constant 0 : i32
    return %c0_i32, %c0_i32_0 : i32, i32
  }
  func.func @transform_13(%arg0: i32) -> (i32, i32) {
    %c0_i32 = arith.constant 0 : i32
    %c0_i32_0 = arith.constant 0 : i32
    %c0_i32_1 = arith.constant 0 : i32
    return %c0_i32, %c0_i32_0 : i32, i32
  }
  func.func @transform_14(%arg0: i32) -> (i32, i32) {
    %c0_i32 = arith.constant 0 : i32
    %c0_i32_0 = arith.constant 0 : i32
    %c0_i32_1 = arith.constant 0 : i32
    return %c0_i32, %c0_i32_0 : i32, i32
  }
  func.func @transform_15(%arg0: i32) -> (i32, i32) {
    %c0_i32 = arith.constant 0 : i32
    %c0_i32_0 = arith.constant 0 : i32
    %c0_i32_1 = arith.constant 0 : i32
    return %c0_i32, %c0_i32_0 : i32, i32
  }
}

</mosaic_0001>

<llo_original>
// kernel: tpu_custom_call.1
$region0: #{tpu_custom_call.1}
  #allocation0 [shape = 'u32[]', space=smem, size = 0x4, offset = 0x4, fixed_abs, tag = 'smem constant byte address 0x4 - core index']
  #allocation1 [shape = 'u32[144,128]{1,0:T(1,128)}', space=vmem, size = 0x12000, scoped, tag = 'internal scratch']
  #allocation2 [shape = 'f32[16,33]{1,0:T(8,128)}', space=vmem, size = 0x2000, scoped, tag = 'scratch operand']
  %s0 = inlined_call_operand.vmem [shape: f32[16,8], index: 0, kind: input, shape index: {}]
  %s1 = inlined_call_operand.vmem [shape: bf16[8,32], index: 1, kind: input, shape index: {}]
  %s2 = inlined_call_operand.vmem [shape: f32[4,32,4], index: 2, kind: input, shape index: {}]
  %s3 = inlined_call_operand.vmem [shape: f32[4,16,1], index: 3, kind: input, shape index: {}]
  %s4 = inlined_call_operand.vmem [shape: bf16[32,16], index: 4, kind: input, shape index: {}]
  %s5 = inlined_call_operand.vmem [shape: bf16[32,16], index: 5, kind: input, shape index: {}]
  %s6 = inlined_call_operand.vmem [shape: bf16[2,33,8], index: 6, kind: input, shape index: {}]
  %s7 = inlined_call_operand.vmem [shape: bf16[2,33,8], index: 7, kind: input, shape index: {}]
  %s8 = inlined_call_operand.vmem [shape: bf16[4,8], index: 8, kind: input, shape index: {}]
  %s9 = inlined_call_operand.vmem [shape: bf16[1,8,8], index: 9, kind: input, shape index: {}]
  %s10 = inlined_call_operand.vmem [shape: bf16[8,32], index: 10, kind: input, shape index: {}]
  %s11 = inlined_call_operand.vmem [shape: bf16[4,32], index: 11, kind: input, shape index: {}]
  %s12 = inlined_call_operand.vmem [shape: bf16[32,32], index: 12, kind: input, shape index: {}]
  %s13 = inlined_call_operand.vmem [shape: f32[1,32], index: 13, kind: input, shape index: {}]
  %s14 = inlined_call_operand.vmem [shape: bf16[32,1], index: 14, kind: input, shape index: {}]
  %s15 = inlined_call_operand.vmem [shape: f32[16,4], index: 15, kind: output, shape index: {}]
  %s16 = sld [smem:[#allocation0]]
  $region97: #{tpu_custom_call.1} parent=0
    _
  %s18 = ssub.s32 1, %s16
  %s19 = scalar_select 0, %s18, %s16
  loop: start=0, step=1, limit=6
  $region2: #{tpu_custom_call.1} parent=0 // loop_pre_header
    _
  $region3: #{tpu_custom_call.1} parent=0 // loop_header
    %s21 = sphi 0, %s25
    %p22 = scmp.ge.s32.totalorder %s21, 6
    %s29 = sphi 0, %s29
    %s31 = sphi 0, %s29
    %s32 = sphi 0, %s31
    %s46 = sphi 0, %s32
    %s50 = sphi 0, %s50
    %s52 = sphi 0, %s50
    %s53 = sphi 0, %s52
    %s67 = sphi 0, %s53
    %s73 = sphi 0, %s75
    %s76 = sphi 0, %s73
    %s77 = sphi 0, %s76
    %s93 = sphi 0, %s77
    %s99 = sphi 0, %s101
    %s102 = sphi 0, %s99
    %s103 = sphi 0, %s102
    %s119 = sphi 0, %s103
    %s123 = sphi 0, %s123
    %s125 = sphi 0, %s123
    %s126 = sphi 0, %s125
    %s140 = sphi 0, %s126
    %s144 = sphi 0, %s144
    %s146 = sphi 0, %s144
    %s147 = sphi 0, %s146
    %s161 = sphi 0, %s147
    %s165 = sphi 0, %s165
    %s167 = sphi 0, %s165
    %s168 = sphi 0, %s167
    %s182 = sphi 0, %s168
    %s186 = sphi 0, %s186
    %s188 = sphi 0, %s186
    %s189 = sphi 0, %s188
    %s203 = sphi 0, %s189
    %s207 = sphi 0, %s207
    %s209 = sphi 0, %s207
    %s210 = sphi 0, %s209
    %s224 = sphi 0, %s210
    %s228 = sphi 0, %s228
    %s230 = sphi 0, %s228
    %s231 = sphi 0, %s230
    %s245 = sphi 0, %s231
    %s249 = sphi 0, %s249
    %s251 = sphi 0, %s249
    %s252 = sphi 0, %s251
    %s266 = sphi 0, %s252
    %s270 = sphi 0, %s270
    %s272 = sphi 0, %s270
    %s273 = sphi 0, %s272
    %s287 = sphi 0, %s273
    %s291 = sphi 0, %s291
    %s293 = sphi 0, %s291
    %s294 = sphi 0, %s293
    %s308 = sphi 0, %s294
    %s312 = sphi 0, %s312
    %s314 = sphi 0, %s312
    %s315 = sphi 0, %s314
    %s329 = sphi 0, %s315
    %s333 = sphi 0, %s333
    %s335 = sphi 0, %s333
    %s336 = sphi 0, %s335
    %s350 = sphi 0, %s336
    %s354 = sphi 0, %s354
    %s356 = sphi 0, %s354
    %s357 = sphi 0, %s356
    %s371 = sphi 0, %s357
  $region4: #{tpu_custom_call.1} parent=0 // loop_header_branch
    %24 = sbr.rel (%p22) target = $region8
  $region5: #{tpu_custom_call.1} parent=0 // loop_body
    %s26 = ssub.s32 %s21, 1
    %s27 = ssub.s32 %s21, 2
    %s28 = sadd.s32 %s21, 1
    %s30 = sadd.s32 %s29, 1
    %p33 = scmp.eq.s32.totalorder %s21, 3
    %p34 = scmp.ne.s32.totalorder %s29, %s31
    %p35 = scmp.eq.s32.totalorder %s21, 0
    %p36 = por %p34, %p35
    %p37 = scmp.ne.s32.totalorder %s29, %s31
    %p38 = scmp.eq.s32.totalorder %s26, 3
    %p39 = por %p37, %p38
    %p40 = scmp.ne.s32.totalorder %s31, %s32
    %p41 = scmp.eq.s32.totalorder %s26, 0
    %p42 = por %p40, %p41
    %p43 = scmp.ne.s32.totalorder %s31, %s32
    %p44 = scmp.eq.s32.totalorder %s27, 3
    %p45 = por %p43, %p44
    %p47 = scmp.ne.s32.totalorder %s32, %s46
    %p48 = scmp.eq.s32.totalorder %s27, 0
    %p49 = por %p47, %p48
    %s51 = sadd.s32 %s50, 1
    %p54 = scmp.eq.s32.totalorder %s21, 3
    %p55 = scmp.ne.s32.totalorder %s50, %s52
    %p56 = scmp.eq.s32.totalorder %s21, 0
    %p57 = por %p55, %p56
    %p58 = scmp.ne.s32.totalorder %s50, %s52
    %p59 = scmp.eq.s32.totalorder %s26, 3
    %p60 = por %p58, %p59
    %p61 = scmp.ne.s32.totalorder %s52, %s53
    %p62 = scmp.eq.s32.totalorder %s26, 0
    %p63 = por %p61, %p62
    %p64 = scmp.ne.s32.totalorder %s52, %s53
    %p65 = scmp.eq.s32.totalorder %s27, 3
    %p66 = por %p64, %p65
    %p68 = scmp.ne.s32.totalorder %s53, %s67
    %p69 = scmp.eq.s32.totalorder %s27, 0
    %p70 = por %p68, %p69
    %s71 = ssub.s32 %s21, %s28
    %p72 = scmp.eq.s32.totalorder %s71, 0
    %s74 = sadd.s32 %s73, 1
    %s75 = scalar_select %p72, %s73, %s74
    %p78 = pneg %p72
    %p79 = scmp.eq.s32.totalorder %s21, 3
    %p80 = por %p78, %p79
    %p81 = scmp.ne.s32.totalorder %s73, %s76
    %p82 = scmp.eq.s32.totalorder %s21, 0
    %p83 = por %p81, %p82
    %p84 = scmp.ne.s32.totalorder %s73, %s76
    %p85 = scmp.eq.s32.totalorder %s26, 3
    %p86 = por %p84, %p85
    %p87 = scmp.ne.s32.totalorder %s76, %s77
    %p88 = scmp.eq.s32.totalorder %s26, 0
    %p89 = por %p87, %p88
    %p90 = scmp.ne.s32.totalorder %s76, %s77
    %p91 = scmp.eq.s32.totalorder %s27, 3
    %p92 = por %p90, %p91
    %p94 = scmp.ne.s32.totalorder %s77, %s93
    %p95 = scmp.eq.s32.totalorder %s27, 0
    %p96 = por %p94, %p95
    %s97 = ssub.s32 %s21, %s28
    %p98 = scmp.eq.s32.totalorder %s97, 0
    %s100 = sadd.s32 %s99, 1
    %s101 = scalar_select %p98, %s99, %s100
    %p104 = pneg %p98
    %p105 = scmp.eq.s32.totalorder %s21, 3
    %p106 = por %p104, %p105
    %p107 = scmp.ne.s32.totalorder %s99, %s102
    %p108 = scmp.eq.s32.totalorder %s21, 0
    %p109 = por %p107, %p108
    %p110 = scmp.ne.s32.totalorder %s99, %s102
    %p111 = scmp.eq.s32.totalorder %s26, 3
    %p112 = por %p110, %p111
    %p113 = scmp.ne.s32.totalorder %s102, %s103
    %p114 = scmp.eq.s32.totalorder %s26, 0
    %p115 = por %p113, %p114
    %p116 = scmp.ne.s32.totalorder %s102, %s103
    %p117 = scmp.eq.s32.totalorder %s27, 3
    %p118 = por %p116, %p117
    %p120 = scmp.ne.s32.totalorder %s103, %s119
    %p121 = scmp.eq.s32.totalorder %s27, 0
    %p122 = por %p120, %p121
    %s124 = sadd.s32 %s123, 1
    %p127 = scmp.eq.s32.totalorder %s21, 3
    %p128 = scmp.ne.s32.totalorder %s123, %s125
    %p129 = scmp.eq.s32.totalorder %s21, 0
    %p130 = por %p128, %p129
    %p131 = scmp.ne.s32.totalorder %s123, %s125
    %p132 = scmp.eq.s32.totalorder %s26, 3
    %p133 = por %p131, %p132
    %p134 = scmp.ne.s32.totalorder %s125, %s126
    %p135 = scmp.eq.s32.totalorder %s26, 0
    %p136 = por %p134, %p135
    %p137 = scmp.ne.s32.totalorder %s125, %s126
    %p138 = scmp.eq.s32.totalorder %s27, 3
    %p139 = por %p137, %p138
    %p141 = scmp.ne.s32.totalorder %s126, %s140
    %p142 = scmp.eq.s32.totalorder %s27, 0
    %p143 = por %p141, %p142
    %s145 = sadd.s32 %s144, 1
    %p148 = scmp.eq.s32.totalorder %s21, 3
    %p149 = scmp.ne.s32.totalorder %s144, %s146
    %p150 = scmp.eq.s32.totalorder %s21, 0
    %p151 = por %p149, %p150
    %p152 = scmp.ne.s32.totalorder %s144, %s146
    %p153 = scmp.eq.s32.totalorder %s26, 3
    %p154 = por %p152, %p153
    %p155 = scmp.ne.s32.totalorder %s146, %s147
    %p156 = scmp.eq.s32.totalorder %s26, 0
    %p157 = por %p155, %p156
    %p158 = scmp.ne.s32.totalorder %s146, %s147
    %p159 = scmp.eq.s32.totalorder %s27, 3
    %p160 = por %p158, %p159
    %p162 = scmp.ne.s32.totalorder %s147, %s161
    %p163 = scmp.eq.s32.totalorder %s27, 0
    %p164 = por %p162, %p163
    %s166 = sadd.s32 %s165, 1
    %p169 = scmp.eq.s32.totalorder %s21, 3
    %p170 = scmp.ne.s32.totalorder %s165, %s167
    %p171 = scmp.eq.s32.totalorder %s21, 0
    %p172 = por %p170, %p171
    %p173 = scmp.ne.s32.totalorder %s165, %s167
    %p174 = scmp.eq.s32.totalorder %s26, 3
    %p175 = por %p173, %p174
    %p176 = scmp.ne.s32.totalorder %s167, %s168
    %p177 = scmp.eq.s32.totalorder %s26, 0
    %p178 = por %p176, %p177
    %p179 = scmp.ne.s32.totalorder %s167, %s168
    %p180 = scmp.eq.s32.totalorder %s27, 3
    %p181 = por %p179, %p180
    %p183 = scmp.ne.s32.totalorder %s168, %s182
    %p184 = scmp.eq.s32.totalorder %s27, 0
    %p185 = por %p183, %p184
    %s187 = sadd.s32 %s186, 1
    %p190 = scmp.eq.s32.totalorder %s21, 3
    %p191 = scmp.ne.s32.totalorder %s186, %s188
    %p192 = scmp.eq.s32.totalorder %s21, 0
    %p193 = por %p191, %p192
    %p194 = scmp.ne.s32.totalorder %s186, %s188
    %p195 = scmp.eq.s32.totalorder %s26, 3
    %p196 = por %p194, %p195
    %p197 = scmp.ne.s32.totalorder %s188, %s189
    %p198 = scmp.eq.s32.totalorder %s26, 0
    %p199 = por %p197, %p198
    %p200 = scmp.ne.s32.totalorder %s188, %s189
    %p201 = scmp.eq.s32.totalorder %s27, 3
    %p202 = por %p200, %p201
    %p204 = scmp.ne.s32.totalorder %s189, %s203
    %p205 = scmp.eq.s32.totalorder %s27, 0
    %p206 = por %p204, %p205
    %s208 = sadd.s32 %s207, 1
    %p211 = scmp.eq.s32.totalorder %s21, 3
    %p212 = scmp.ne.s32.totalorder %s207, %s209
    %p213 = scmp.eq.s32.totalorder %s21, 0
    %p214 = por %p212, %p213
    %p215 = scmp.ne.s32.totalorder %s207, %s209
    %p216 = scmp.eq.s32.totalorder %s26, 3
    %p217 = por %p215, %p216
    %p218 = scmp.ne.s32.totalorder %s209, %s210
    %p219 = scmp.eq.s32.totalorder %s26, 0
    %p220 = por %p218, %p219
    %p221 = scmp.ne.s32.totalorder %s209, %s210
    %p222 = scmp.eq.s32.totalorder %s27, 3
    %p223 = por %p221, %p222
    %p225 = scmp.ne.s32.totalorder %s210, %s224
    %p226 = scmp.eq.s32.totalorder %s27, 0
    %p227 = por %p225, %p226
    %s229 = sadd.s32 %s228, 1
    %p232 = scmp.eq.s32.totalorder %s21, 3
    %p233 = scmp.ne.s32.totalorder %s228, %s230
    %p234 = scmp.eq.s32.totalorder %s21, 0
    %p235 = por %p233, %p234
    %p236 = scmp.ne.s32.totalorder %s228, %s230
    %p237 = scmp.eq.s32.totalorder %s26, 3
    %p238 = por %p236, %p237
    %p239 = scmp.ne.s32.totalorder %s230, %s231
    %p240 = scmp.eq.s32.totalorder %s26, 0
    %p241 = por %p239, %p240
    %p242 = scmp.ne.s32.totalorder %s230, %s231
    %p243 = scmp.eq.s32.totalorder %s27, 3
    %p244 = por %p242, %p243
    %p246 = scmp.ne.s32.totalorder %s231, %s245
    %p247 = scmp.eq.s32.totalorder %s27, 0
    %p248 = por %p246, %p247
    %s250 = sadd.s32 %s249, 1
    %p253 = scmp.eq.s32.totalorder %s21, 3
    %p254 = scmp.ne.s32.totalorder %s249, %s251
    %p255 = scmp.eq.s32.totalorder %s21, 0
    %p256 = por %p254, %p255
    %p257 = scmp.ne.s32.totalorder %s249, %s251
    %p258 = scmp.eq.s32.totalorder %s26, 3
    %p259 = por %p257, %p258
    %p260 = scmp.ne.s32.totalorder %s251, %s252
    %p261 = scmp.eq.s32.totalorder %s26, 0
    %p262 = por %p260, %p261
    %p263 = scmp.ne.s32.totalorder %s251, %s252
    %p264 = scmp.eq.s32.totalorder %s27, 3
    %p265 = por %p263, %p264
    %p267 = scmp.ne.s32.totalorder %s252, %s266
    %p268 = scmp.eq.s32.totalorder %s27, 0
    %p269 = por %p267, %p268
    %s271 = sadd.s32 %s270, 1
    %p274 = scmp.eq.s32.totalorder %s21, 3
    %p275 = scmp.ne.s32.totalorder %s270, %s272
    %p276 = scmp.eq.s32.totalorder %s21, 0
    %p277 = por %p275, %p276
    %p278 = scmp.ne.s32.totalorder %s270, %s272
    %p279 = scmp.eq.s32.totalorder %s26, 3
    %p280 = por %p278, %p279
    %p281 = scmp.ne.s32.totalorder %s272, %s273
    %p282 = scmp.eq.s32.totalorder %s26, 0
    %p283 = por %p281, %p282
    %p284 = scmp.ne.s32.totalorder %s272, %s273
    %p285 = scmp.eq.s32.totalorder %s27, 3
    %p286 = por %p284, %p285
    %p288 = scmp.ne.s32.totalorder %s273, %s287
    %p289 = scmp.eq.s32.totalorder %s27, 0
    %p290 = por %p288, %p289
    %s292 = sadd.s32 %s291, 1
    %p295 = scmp.eq.s32.totalorder %s21, 3
    %p296 = scmp.ne.s32.totalorder %s291, %s293
    %p297 = scmp.eq.s32.totalorder %s21, 0
    %p298 = por %p296, %p297
    %p299 = scmp.ne.s32.totalorder %s291, %s293
    %p300 = scmp.eq.s32.totalorder %s26, 3
    %p301 = por %p299, %p300
    %p302 = scmp.ne.s32.totalorder %s293, %s294
    %p303 = scmp.eq.s32.totalorder %s26, 0
    %p304 = por %p302, %p303
    %p305 = scmp.ne.s32.totalorder %s293, %s294
    %p306 = scmp.eq.s32.totalorder %s27, 3
    %p307 = por %p305, %p306
    %p309 = scmp.ne.s32.totalorder %s294, %s308
    %p310 = scmp.eq.s32.totalorder %s27, 0
    %p311 = por %p309, %p310
    %s313 = sadd.s32 %s312, 1
    %p316 = scmp.eq.s32.totalorder %s21, 3
    %p317 = scmp.ne.s32.totalorder %s312, %s314
    %p318 = scmp.eq.s32.totalorder %s21, 0
    %p319 = por %p317, %p318
    %p320 = scmp.ne.s32.totalorder %s312, %s314
    %p321 = scmp.eq.s32.totalorder %s26, 3
    %p322 = por %p320, %p321
    %p323 = scmp.ne.s32.totalorder %s314, %s315
    %p324 = scmp.eq.s32.totalorder %s26, 0
    %p325 = por %p323, %p324
    %p326 = scmp.ne.s32.totalorder %s314, %s315
    %p327 = scmp.eq.s32.totalorder %s27, 3
    %p328 = por %p326, %p327
    %p330 = scmp.ne.s32.totalorder %s315, %s329
    %p331 = scmp.eq.s32.totalorder %s27, 0
    %p332 = por %p330, %p331
    %s334 = sadd.s32 %s333, 1
    %p337 = scmp.eq.s32.totalorder %s21, 3
    %p338 = scmp.ne.s32.totalorder %s333, %s335
    %p339 = scmp.eq.s32.totalorder %s21, 0
    %p340 = por %p338, %p339
    %p341 = scmp.ne.s32.totalorder %s333, %s335
    %p342 = scmp.eq.s32.totalorder %s26, 3
    %p343 = por %p341, %p342
    %p344 = scmp.ne.s32.totalorder %s335, %s336
    %p345 = scmp.eq.s32.totalorder %s26, 0
    %p346 = por %p344, %p345
    %p347 = scmp.ne.s32.totalorder %s335, %s336
    %p348 = scmp.eq.s32.totalorder %s27, 3
    %p349 = por %p347, %p348
    %p351 = scmp.ne.s32.totalorder %s336, %s350
    %p352 = scmp.eq.s32.totalorder %s27, 0
    %p353 = por %p351, %p352
    %s355 = sadd.s32 %s354, 1
    %p358 = scmp.eq.s32.totalorder %s21, 3
    %p359 = scmp.ne.s32.totalorder %s354, %s356
    %p360 = scmp.eq.s32.totalorder %s21, 0
    %p361 = por %p359, %p360
    %p362 = scmp.ne.s32.totalorder %s354, %s356
    %p363 = scmp.eq.s32.totalorder %s26, 3
    %p364 = por %p362, %p363
    %p365 = scmp.ne.s32.totalorder %s356, %s357
    %p366 = scmp.eq.s32.totalorder %s26, 0
    %p367 = por %p365, %p366
    %p368 = scmp.ne.s32.totalorder %s356, %s357
    %p369 = scmp.eq.s32.totalorder %s27, 3
    %p370 = por %p368, %p369
    %p372 = scmp.ne.s32.totalorder %s357, %s371
    %p373 = scmp.eq.s32.totalorder %s27, 0
    %p374 = por %p372, %p373
    %p375 = scmp.le.s32.totalorder 1, %s21
    %p376 = scmp.lt.s32.totalorder %s21, 5
    %p377 = pnand %p375, %p376
    %p378 = pneg %p377
    // Predicated region
    $region9: #{tpu_custom_call.1} parent=5 // pred_check
      _
    $region10: #{tpu_custom_call.1} parent=5 // pred_check_branch
      %380 = sbr.rel (%p377) target = $region12
    $region11: #{tpu_custom_call.1} parent=5 // pred_region
      %s381 = ssub.s32 %s21, 1
      // Predicated region
      $region13: #{tpu_custom_call.1} parent=11 // pred_check
        %p382 = pneg %p42
      $region14: #{tpu_custom_call.1} parent=11 // pred_check_branch
        %384 = sbr.rel (%p382) target = $region16
      $region15: #{tpu_custom_call.1} parent=11 // pred_region
        _
      $region16: #{tpu_custom_call.1} parent=11 // pred_fallthru
        _
      // Predicated region
      $region17: #{tpu_custom_call.1} parent=11 // pred_check
        %p385 = pneg %p63
      $region18: #{tpu_custom_call.1} parent=11 // pred_check_branch
        %387 = sbr.rel (%p385) target = $region20
      $region19: #{tpu_custom_call.1} parent=11 // pred_region
        _
      $region20: #{tpu_custom_call.1} parent=11 // pred_fallthru
        _
      // Predicated region
      $region21: #{tpu_custom_call.1} parent=11 // pred_check
        %p388 = pneg %p136
      $region22: #{tpu_custom_call.1} parent=11 // pred_check_branch
        %390 = sbr.rel (%p388) target = $region24
      $region23: #{tpu_custom_call.1} parent=11 // pred_region
        _
      $region24: #{tpu_custom_call.1} parent=11 // pred_fallthru
        _
      // Predicated region
      $region25: #{tpu_custom_call.1} parent=11 // pred_check
        %p391 = pneg %p157
      $region26: #{tpu_custom_call.1} parent=11 // pred_check_branch
        %393 = sbr.rel (%p391) target = $region28
      $region27: #{tpu_custom_call.1} parent=11 // pred_region
        _
      $region28: #{tpu_custom_call.1} parent=11 // pred_fallthru
        _
      // Predicated region
      $region29: #{tpu_custom_call.1} parent=11 // pred_check
        %p394 = pneg %p178
      $region30: #{tpu_custom_call.1} parent=11 // pred_check_branch
        %396 = sbr.rel (%p394) target = $region32
      $region31: #{tpu_custom_call.1} parent=11 // pred_region
        _
      $region32: #{tpu_custom_call.1} parent=11 // pred_fallthru
        _
      // Predicated region
      $region33: #{tpu_custom_call.1} parent=11 // pred_check
        %p397 = pneg %p199
      $region34: #{tpu_custom_call.1} parent=11 // pred_check_branch
        %399 = sbr.rel (%p397) target = $region36
      $region35: #{tpu_custom_call.1} parent=11 // pred_region
        _
      $region36: #{tpu_custom_call.1} parent=11 // pred_fallthru
        _
      // Predicated region
      $region37: #{tpu_custom_call.1} parent=11 // pred_check
        %p400 = pneg %p220
      $region38: #{tpu_custom_call.1} parent=11 // pred_check_branch
        %402 = sbr.rel (%p400) target = $region40
      $region39: #{tpu_custom_call.1} parent=11 // pred_region
        _
      $region40: #{tpu_custom_call.1} parent=11 // pred_fallthru
        _
      // Predicated region
      $region41: #{tpu_custom_call.1} parent=11 // pred_check
        %p403 = pneg %p241
      $region42: #{tpu_custom_call.1} parent=11 // pred_check_branch
        %405 = sbr.rel (%p403) target = $region44
      $region43: #{tpu_custom_call.1} parent=11 // pred_region
        _
      $region44: #{tpu_custom_call.1} parent=11 // pred_fallthru
        _
      // Predicated region
      $region45: #{tpu_custom_call.1} parent=11 // pred_check
        %p406 = pneg %p262
      $region46: #{tpu_custom_call.1} parent=11 // pred_check_branch
        %408 = sbr.rel (%p406) target = $region48
      $region47: #{tpu_custom_call.1} parent=11 // pred_region
        _
      $region48: #{tpu_custom_call.1} parent=11 // pred_fallthru
        _
      // Predicated region
      $region49: #{tpu_custom_call.1} parent=11 // pred_check
        %p409 = pneg %p283
      $region50: #{tpu_custom_call.1} parent=11 // pred_check_branch
        %411 = sbr.rel (%p409) target = $region52
      $region51: #{tpu_custom_call.1} parent=11 // pred_region
        _
      $region52: #{tpu_custom_call.1} parent=11 // pred_fallthru
        _
      // Predicated region
      $region53: #{tpu_custom_call.1} parent=11 // pred_check
        %p412 = pneg %p304
      $region54: #{tpu_custom_call.1} parent=11 // pred_check_branch
        %414 = sbr.rel (%p412) target = $region56
      $region55: #{tpu_custom_call.1} parent=11 // pred_region
        _
      $region56: #{tpu_custom_call.1} parent=11 // pred_fallthru
        _
      // Predicated region
      $region57: #{tpu_custom_call.1} parent=11 // pred_check
        %p415 = pneg %p325
      $region58: #{tpu_custom_call.1} parent=11 // pred_check_branch
        %417 = sbr.rel (%p415) target = $region60
      $region59: #{tpu_custom_call.1} parent=11 // pred_region
        _
      $region60: #{tpu_custom_call.1} parent=11 // pred_fallthru
        _
      // Predicated region
      $region61: #{tpu_custom_call.1} parent=11 // pred_check
        %p418 = pneg %p346
      $region62: #{tpu_custom_call.1} parent=11 // pred_check_branch
        %420 = sbr.rel (%p418) target = $region64
      $region63: #{tpu_custom_call.1} parent=11 // pred_region
        _
      $region64: #{tpu_custom_call.1} parent=11 // pred_fallthru
        _
    $region12: #{tpu_custom_call.1} parent=5 // pred_fallthru
      _
    %p421 = scmp.lt.s32.totalorder %s21, 4
    // Predicated region
    $region65: #{tpu_custom_call.1} parent=5 // pred_check
      %p422 = pneg %p421
    $region66: #{tpu_custom_call.1} parent=5 // pred_check_branch
      %424 = sbr.rel (%p422) target = $region68
    $region67: #{tpu_custom_call.1} parent=5 // pred_region
      // Predicated region
      $region69: #{tpu_custom_call.1} parent=67 // pred_check
        %p425 = pneg %p83
      $region70: #{tpu_custom_call.1} parent=67 // pred_check_branch
        %427 = sbr.rel (%p425) target = $region72
      $region71: #{tpu_custom_call.1} parent=67 // pred_region
        %p428 = scmp.lt.s32.totalorder %s21, 3
        %s429 = scalar_select %p428, %s21, 3
        %s430 = smul.addr %s429, 4
        %s431 = smul.addr %s430, 8
        %s432 = scalar_lea.vmem %s2, %s431
      $region72: #{tpu_custom_call.1} parent=67 // pred_fallthru
        _
      // Predicated region
      $region73: #{tpu_custom_call.1} parent=67 // pred_check
        %p433 = pneg %p109
      $region74: #{tpu_custom_call.1} parent=67 // pred_check_branch
        %435 = sbr.rel (%p433) target = $region76
      $region75: #{tpu_custom_call.1} parent=67 // pred_region
        %p436 = scmp.lt.s32.totalorder %s21, 3
        %s437 = scalar_select %p436, %s21, 3
        %s438 = smul.addr %s437, 2
        %s439 = smul.addr %s438, 8
        %s440 = scalar_lea.vmem %s3, %s439
      $region76: #{tpu_custom_call.1} parent=67 // pred_fallthru
        _
    $region68: #{tpu_custom_call.1} parent=5 // pred_fallthru
      _
    %p441 = scmp.le.s32.totalorder 1, %s21
    %p442 = scmp.lt.s32.totalorder %s21, 5
    %p443 = pnand %p441, %p442
    %p444 = pneg %p443
    // Predicated region
    $region77: #{tpu_custom_call.1} parent=5 // pred_check
      _
    $region78: #{tpu_custom_call.1} parent=5 // pred_check_branch
      %446 = sbr.rel (%p443) target = $region80
    $region79: #{tpu_custom_call.1} parent=5 // pred_region
      %s447 = ssub.s32 %s21, 1
      %p448 = pneg %p42
      %p449 = pneg %p39
      %p450 = pneg %p63
      %p451 = pneg %p60
      %p452 = scmp.lt.s32.totalorder %s26, 3
      %s453 = scalar_select %p452, %s26, 3
      %s454 = smul.addr %s453, 4
      %s455 = smul.addr %s454, 8
      %s456 = scalar_lea.vmem %s2, %s455
      %p457 = pneg %p89
      %p458 = pneg %p86
      %p459 = scmp.lt.s32.totalorder %s26, 3
      %s460 = scalar_select %p459, %s26, 3
      %s461 = smul.addr %s460, 2
      %s462 = smul.addr %s461, 8
      %s463 = scalar_lea.vmem %s3, %s462
      %p464 = pneg %p115
      %p465 = pneg %p112
      %p466 = pneg %p136
      %p467 = pneg %p133
      %p468 = pneg %p157
      %p469 = pneg %p154
      %p470 = pneg %p178
      %p471 = pneg %p175
      %p472 = pneg %p199
      %p473 = pneg %p196
      %p474 = pneg %p220
      %p475 = pneg %p217
      %p476 = pneg %p241
      %p477 = pneg %p238
      %p478 = pneg %p262
      %p479 = pneg %p259
      %p480 = pneg %p283
      %p481 = pneg %p280
      %p482 = pneg %p304
      %p483 = pneg %p301
      %p484 = pneg %p325
      %p485 = pneg %p322
      %p486 = pneg %p346
      %p487 = pneg %p343
      %p488 = pneg %p367
      %p489 = pneg %p364
      %p490 = scmp.lt.s32.totalorder %s26, 3
      %s491 = scalar_select %p490, %s26, 3
      %s492 = smul.addr %s491, 4
      %s493 = smul.addr %s492, 8
      %s494 = scalar_lea.vmem %s2, %s493
      %p495 = scmp.lt.s32.totalorder %s26, 3
      %s496 = scalar_select %p495, %s26, 3
      %s497 = smul.addr %s496, 2
      %s498 = smul.addr %s497, 8
      %s499 = scalar_lea.vmem %s3, %s498
      %p501 = scmp.eq.s32.totalorder %s26, 0
      // Predicated region
      $region81: #{tpu_custom_call.1} parent=79 // pred_check
        %p502 = pneg %p501
      $region82: #{tpu_custom_call.1} parent=79 // pred_check_branch
        %504 = sbr.rel (%p502) target = $region84
      $region83: #{tpu_custom_call.1} parent=79 // pred_region
        %v505 = vld [vmem:[%s0] sm:$0xff]
        %v506 = vld [vmem:[%s0 + $0x8] sm:$0xff]
        %v507 = vpack.c.bf16 %v506, %v505
        %v508 = vld [vmem:[%s1] sm:$0xf]
        %vm509 = vcmask 64512
        %v511 = vsel %vm509, %v507, 0
        %vm513 = vcmask 1043456
        %v515 = vsel %vm513, %v508, 0
        %517 = vmatprep.subr.bf16.mxu0 0
        %518 = vmatpush1.bf16.msra.mxu0 0
        %519 = vmatprep.subr.bf16.mxu0 0
        %520 = vmatpush1.bf16.msra.mxu0 0
        %521 = vmatprep.subr.bf16.mxu0 0
        %522 = vmatpush1.bf16.msra.mxu0 0
        %523 = vmatprep.subr.bf16.mxu0 0
        %524 = vmatpush1.bf16.msra.mxu0 0
        %525 = vmatprep.subr.bf16.mxu0 0
        %526 = vmatpush1.bf16.msra.mxu0 0
        %527 = vmatprep.subr.bf16.mxu0 0
        %528 = vmatpush1.bf16.msra.mxu0 0
        %529 = vmatprep.subr.bf16.mxu0 0
        %530 = vmatpush1.bf16.msra.mxu0 0
        %531 = vmatprep.subr.bf16.mxu0 0
        %532 = vmatpush1.bf16.msra.mxu0 %v515
        %533 = vmatprep.subr.bf16.mxu0 0
        %534 = vmatpush2.bf16.msra.mxu0 0
        %535 = vmatprep.subr.bf16.mxu0 0
        %536 = vmatpush2.bf16.msra.mxu0 0
        %537 = vmatprep.subr.bf16.mxu0 0
        %538 = vmatpush2.bf16.msra.mxu0 0
        %539 = vmatprep.subr.bf16.mxu0 0
        %540 = vmatpush2.bf16.msra.mxu0 0
        %541 = vmatprep.subr.bf16.mxu0 0
        %542 = vmatpush2.bf16.msra.mxu0 0
        %543 = vmatprep.subr.bf16.mxu0 0
        %544 = vmatpush2.bf16.msra.mxu0 0
        %545 = vmatprep.subr.bf16.mxu0 0
        %546 = vmatpush2.bf16.msra.mxu0 0
        %547 = vmatprep.subr.bf16.mxu0 0
        %548 = vmatpush2.bf16.msra.mxu0 0
        %549 = vmatprep.mubr.bf16.mxu0 0
        %550 = vmatmul.mubr.bf16.gmra.mxu0 %v511
        %v551 = vpop.f32.mrf.mxu0
        %v552 = vadd.f32 0.0, %v551
        %v553 = vpop.f32.mrf.mxu0
        %v554 = vpop.f32.mrf.mxu0
        %v555 = vadd.f32 0.0, %v554
        %v556 = vpop.f32.mrf.mxu0
        %557 = vdwg.mxu0
        %vm558 = vcmask 261120
        %559 = vst.msk [vmem:[#allocation2] sm:$0xff] %vm558, %v552
        %560 = vst.msk [vmem:[#allocation2 + $0x8] sm:$0xff] %vm558, %v555
        %vm561 = vcmask 31744
        %562 = vst.msk [vmem:[%s15] sm:$0xff] %vm561, 0.0
        %563 = vst.msk [vmem:[%s15 + $0x8] sm:$0xff] %vm561, 0.0
      $region84: #{tpu_custom_call.1} parent=79 // pred_fallthru
        _
      %v564 = vld [vmem:[%s499] sm:$0xff]
      %v565 = vld [vmem:[%s499 + $0x8] sm:$0xff]
      %568 = vrot.lane.b32.xlu0 %v564, 32
      %v569 = vpop.permute.xlu0 %568
      %570 = vrot.lane.b32.xlu0 %v565, 32
      %v571 = vpop.permute.xlu0 %570
      %vm574 = vcmask 269568
      %575 = vst.msk [vmem:[#allocation2] sm:$0xff] %vm574, %v569
      %576 = vst.msk [vmem:[#allocation2 + $0x8] sm:$0xff] %vm574, %v571
      %v577 = vld [vmem:[#allocation2] sm:$0xff]
      %v578 = vld [vmem:[#allocation2 + $0x8] sm:$0xff]
      %v579 = vpack.c.bf16 %v578, %v577
      %v580 = vld [vmem:[%s494] sm:$0xff]
      %v581 = vld [vmem:[%s494 + $0x8] sm:$0xff]
      %v582 = vld [vmem:[%s494 + $0x10] sm:$0xff]
      %v583 = vld [vmem:[%s494 + $0x18] sm:$0xff]
      %v584 = vld [vmem:[%s4] sm:$0xf]
      %v585 = vld [vmem:[%s4 + $0x4] sm:$0xf]
      %v586 = vld [vmem:[%s4 + $0x8] sm:$0xf]
      %v587 = vld [vmem:[%s4 + $0xc] sm:$0xf]
      %v588 = vld [vmem:[%s5] sm:$0xf]
      %v589 = vld [vmem:[%s5 + $0x4] sm:$0xf]
      %v590 = vld [vmem:[%s5 + $0x8] sm:$0xf]
      %v591 = vld [vmem:[%s5 + $0xc] sm:$0xf]
      %v596 = vunpack.c.l.b16 %v584
      %v597 = vunpack.c.l.b16 %v585
      %v598 = vunpack.c.l.b16 %v586
      %v599 = vunpack.c.l.b16 %v587
      %v600 = vpack.c.b16 %v597, %v596
      %v601 = vpack.c.b16 %v599, %v598
      %vm602 = vcmask 130048
      %v604 = vsel %vm602, %v600, 0
      %v607 = vsel %vm602, %v601, 0
      %609 = vmatprep.subr.bf16.mxu0 0
      %610 = vmatpush1.bf16.msra.mxu0 0
      %611 = vmatprep.subr.bf16.mxu0 0
      %612 = vmatpush1.bf16.msra.mxu0 0
      %613 = vmatprep.subr.bf16.mxu0 0
      %614 = vmatpush1.bf16.msra.mxu0 0
      %615 = vmatprep.subr.bf16.mxu0 0
      %616 = vmatpush1.bf16.msra.mxu0 0
      %617 = vmatprep.subr.bf16.mxu0 0
      %618 = vmatpush1.bf16.msra.mxu0 0
      %619 = vmatprep.subr.bf16.mxu0 0
      %620 = vmatpush1.bf16.msra.mxu0 0
      %621 = vmatprep.subr.bf16.mxu0 0
      %622 = vmatpush1.bf16.msra.mxu0 0
      %623 = vmatprep.subr.bf16.mxu0 0
      %624 = vmatpush1.bf16.msra.mxu0 %v579
      %625 = vmatprep.subr.bf16.mxu0 0
      %626 = vmatpush2.bf16.msra.mxu0 0
      %627 = vmatprep.subr.bf16.mxu0 0
      %628 = vmatpush2.bf16.msra.mxu0 0
      %629 = vmatprep.subr.bf16.mxu0 0
      %630 = vmatpush2.bf16.msra.mxu0 0
      %631 = vmatprep.subr.bf16.mxu0 0
      %632 = vmatpush2.bf16.msra.mxu0 0
      %633 = vmatprep.subr.bf16.mxu0 0
      %634 = vmatpush2.bf16.msra.mxu0 0
      %635 = vmatprep.subr.bf16.mxu0 0
      %636 = vmatpush2.bf16.msra.mxu0 0
      %637 = vmatprep.subr.bf16.mxu0 0
      %638 = vmatpush2.bf16.msra.mxu0 0
      %639 = vmatprep.subr.bf16.mxu0 0
      %640 = vmatpush2.bf16.msra.mxu0 0
      %641 = vmatprep.mubr.bf16.mxu0 0
      %642 = vmatmul.mubr.bf16.gmra.mxu0 %v604
      %v643 = vpop.f32.mrf.mxu0
      %v644 = vadd.f32 0.0, %v643
      %v645 = vpop.f32.mrf.mxu0
      %v646 = vpop.f32.mrf.mxu0
      %v647 = vadd.f32 0.0, %v646
      %v648 = vpop.f32.mrf.mxu0
      %649 = vmatprep.mubr.bf16.mxu0 0
      %650 = vmatmul.mubr.bf16.gmra.mxu0 %v607
      %v651 = vpop.f32.mrf.mxu0
      %v652 = vadd.f32 0.0, %v651
      %v653 = vpop.f32.mrf.mxu0
      %v654 = vpop.f32.mrf.mxu0
      %v655 = vadd.f32 0.0, %v654
      %v656 = vpop.f32.mrf.mxu0
      %657 = vdwg.mxu0
      %v662 = vunpack.c.l.b16 %v588
      %v663 = vunpack.c.l.b16 %v589
      %v664 = vunpack.c.l.b16 %v590
      %v665 = vunpack.c.l.b16 %v591
      %v666 = vpack.c.b16 %v663, %v662
      %v667 = vpack.c.b16 %v665, %v664
      %v669 = vsel %vm602, %v666, 0
      %v672 = vsel %vm602, %v667, 0
      %674 = vmatprep.subr.bf16.mxu0 0
      %675 = vmatpush1.bf16.msra.mxu0 0
      %676 = vmatprep.subr.bf16.mxu0 0
      %677 = vmatpush1.bf16.msra.mxu0 0
      %678 = vmatprep.subr.bf16.mxu0 0
      %679 = vmatpush1.bf16.msra.mxu0 0
      %680 = vmatprep.subr.bf16.mxu0 0
      %681 = vmatpush1.bf16.msra.mxu0 0
      %682 = vmatprep.subr.bf16.mxu0 0
      %683 = vmatpush1.bf16.msra.mxu0 0
      %684 = vmatprep.subr.bf16.mxu0 0
      %685 = vmatpush1.bf16.msra.mxu0 0
      %686 = vmatprep.subr.bf16.mxu0 0
      %687 = vmatpush1.bf16.msra.mxu0 0
      %688 = vmatprep.subr.bf16.mxu0 0
      %689 = vmatpush1.bf16.msra.mxu0 %v579
      %690 = vmatprep.subr.bf16.mxu0 0
      %691 = vmatpush2.bf16.msra.mxu0 0
      %692 = vmatprep.subr.bf16.mxu0 0
      %693 = vmatpush2.bf16.msra.mxu0 0
      %694 = vmatprep.subr.bf16.mxu0 0
      %695 = vmatpush2.bf16.msra.mxu0 0
      %696 = vmatprep.subr.bf16.mxu0 0
      %697 = vmatpush2.bf16.msra.mxu0 0
      %698 = vmatprep.subr.bf16.mxu0 0
      %699 = vmatpush2.bf16.msra.mxu0 0
      %700 = vmatprep.subr.bf16.mxu0 0
      %701 = vmatpush2.bf16.msra.mxu0 0
      %702 = vmatprep.subr.bf16.mxu0 0
      %703 = vmatpush2.bf16.msra.mxu0 0
      %704 = vmatprep.subr.bf16.mxu0 0
      %705 = vmatpush2.bf16.msra.mxu0 0
      %706 = vmatprep.mubr.bf16.mxu0 0
      %707 = vmatmul.mubr.bf16.gmra.mxu0 %v669
      %v708 = vpop.f32.mrf.mxu0
      %v709 = vadd.f32 0.0, %v708
      %v710 = vpop.f32.mrf.mxu0
      %v711 = vpop.f32.mrf.mxu0
      %v712 = vadd.f32 0.0, %v711
      %v713 = vpop.f32.mrf.mxu0
      %714 = vmatprep.mubr.bf16.mxu0 0
      %715 = vmatmul.mubr.bf16.gmra.mxu0 %v672
      %v716 = vpop.f32.mrf.mxu0
      %v717 = vadd.f32 0.0, %v716
      %v718 = vpop.f32.mrf.mxu0
      %v719 = vpop.f32.mrf.mxu0
      %v720 = vadd.f32 0.0, %v719
      %v721 = vpop.f32.mrf.mxu0
      %722 = vdwg.mxu0
      %v723 = vpack.c.bf16 %v647, %v644
      %v724 = vpack.c.bf16 %v655, %v652
      %v725 = vpack.c.bf16 %v712, %v709
      %v726 = vpack.c.bf16 %v720, %v717
      %v727 = vpack.c.bf16 %v581, %v580
      %v728 = vpack.c.bf16 %v583, %v582
      %v729 = vld [vmem:[%s6] sm:$0xf]
      %v730 = vld [vmem:[%s6 + $0x4] sm:$0xf]
      %v731 = vld [vmem:[%s6 + $0x8] sm:$0xf]
      %v732 = vld [vmem:[%s6 + $0xc] sm:$0xf]
      %v733 = vld [vmem:[%s6 + $0x10] sm:$0x1]
      %v734 = vld [vmem:[%s7] sm:$0xf]
      %v735 = vld [vmem:[%s7 + $0x4] sm:$0xf]
      %v736 = vld [vmem:[%s7 + $0x8] sm:$0xf]
      %v737 = vld [vmem:[%s7 + $0xc] sm:$0xf]
      %v738 = vld [vmem:[%s7 + $0x10] sm:$0x1]
      %v744 = vunpack.c.l.b16 %v734
      %v745 = vunpack.c.l.b16 %v735
      %v746 = vunpack.c.l.b16 %v736
      %v747 = vunpack.c.l.b16 %v737
      %v748 = vunpack.c.l.b16 %v738
      %v749 = vpack.c.b16 %v745, %v744
      %v750 = vpack.c.b16 %v747, %v746
      %v751 = vpack.c.b16 %v748, %v748
      %vm754 = vcmask 269312
      %v756 = vsel %vm754, %v725, 0
      %v759 = vsel %vm754, %v726, 0
      %vm761 = vcmask 1040384
      %v762 = vsel 0, 4294967295, 65535
      %v763 = vsel %vm761, %v762, 0
      %v765 = vand.u32 %v751, %v763
      %767 = vmatprep.subr.bf16.mxu0 0
      %768 = vmatpush1.bf16.msra.mxu0 0
      %769 = vmatprep.subr.bf16.mxu0 0
      %770 = vmatpush1.bf16.msra.mxu0 0
      %771 = vmatprep.subr.bf16.mxu0 0
      %772 = vmatpush1.bf16.msra.mxu0 0
      %773 = vmatprep.subr.bf16.mxu0 0
      %774 = vmatpush1.bf16.msra.mxu0 0
      %775 = vmatprep.subr.bf16.mxu0 0
      %776 = vmatpush1.bf16.msra.mxu0 0
      %777 = vmatprep.subr.bf16.mxu0 0
      %778 = vmatpush1.bf16.msra.mxu0 %v765
      %779 = vmatprep.subr.bf16.mxu0 0
      %780 = vmatpush1.bf16.msra.mxu0 %v750
      %781 = vmatprep.subr.bf16.mxu0 0
      %782 = vmatpush1.bf16.msra.mxu0 %v749
      %783 = vmatprep.subr.bf16.mxu0 0
      %784 = vmatpush2.bf16.msra.mxu0 0
      %785 = vmatprep.subr.bf16.mxu0 0
      %786 = vmatpush2.bf16.msra.mxu0 0
      %787 = vmatprep.subr.bf16.mxu0 0
      %788 = vmatpush2.bf16.msra.mxu0 0
      %789 = vmatprep.subr.bf16.mxu0 0
      %790 = vmatpush2.bf16.msra.mxu0 0
      %791 = vmatprep.subr.bf16.mxu0 0
      %792 = vmatpush2.bf16.msra.mxu0 0
      %793 = vmatprep.subr.bf16.mxu0 0
      %794 = vmatpush2.bf16.msra.mxu0 0
      %795 = vmatprep.subr.bf16.mxu0 0
      %796 = vmatpush2.bf16.msra.mxu0 0
      %797 = vmatprep.subr.bf16.mxu0 0
      %798 = vmatpush2.bf16.msra.mxu0 0
      %799 = vmatprep.mubr.bf16.mxu0 0
      %800 = vmatmul.mubr.bf16.gmra.mxu0 %v756
      %v801 = vpop.f32.mrf.mxu0
      %v802 = vadd.f32 0.0, %v801
      %v803 = vpop.f32.mrf.mxu0
      %v804 = vpop.f32.mrf.mxu0
      %v805 = vadd.f32 0.0, %v804
      %v806 = vpop.f32.mrf.mxu0
      %807 = vmatprep.mubr.bf16.mxu0 0
      %808 = vmatmul.mubr.bf16.gmra.mxu0 %v759
      %v809 = vpop.f32.mrf.mxu0
      %v810 = vadd.f32 0.0, %v809
      %v811 = vpop.f32.mrf.mxu0
      %v812 = vpop.f32.mrf.mxu0
      %v813 = vadd.f32 0.0, %v812
      %v814 = vpop.f32.mrf.mxu0
      %815 = vdwg.mxu0
      %v821 = vunpack.c.l.b16 %v729
      %v822 = vunpack.c.l.b16 %v730
      %v823 = vunpack.c.l.b16 %v731
      %v824 = vunpack.c.l.b16 %v732
      %v825 = vunpack.c.l.b16 %v733
      %v826 = vpack.c.b16 %v822, %v821
      %v827 = vpack.c.b16 %v824, %v823
      %v828 = vpack.c.b16 %v825, %v825
      %v832 = vsel %vm754, %v723, 0
      %v835 = vsel %vm754, %v724, 0
      %v838 = vand.u32 %v828, %v763
      %840 = vmatprep.subr.bf16.mxu0 0
      %841 = vmatpush1.bf16.msra.mxu0 0
      %842 = vmatprep.subr.bf16.mxu0 0
      %843 = vmatpush1.bf16.msra.mxu0 0
      %844 = vmatprep.subr.bf16.mxu0 0
      %845 = vmatpush1.bf16.msra.mxu0 0
      %846 = vmatprep.subr.bf16.mxu0 0
      %847 = vmatpush1.bf16.msra.mxu0 0
      %848 = vmatprep.subr.bf16.mxu0 0
      %849 = vmatpush1.bf16.msra.mxu0 0
      %850 = vmatprep.subr.bf16.mxu0 0
      %851 = vmatpush1.bf16.msra.mxu0 %v838
      %852 = vmatprep.subr.bf16.mxu0 0
      %853 = vmatpush1.bf16.msra.mxu0 %v827
      %854 = vmatprep.subr.bf16.mxu0 0
      %855 = vmatpush1.bf16.msra.mxu0 %v826
      %856 = vmatprep.subr.bf16.mxu0 0
      %857 = vmatpush2.bf16.msra.mxu0 0
      %858 = vmatprep.subr.bf16.mxu0 0
      %859 = vmatpush2.bf16.msra.mxu0 0
      %860 = vmatprep.subr.bf16.mxu0 0
      %861 = vmatpush2.bf16.msra.mxu0 0
      %862 = vmatprep.subr.bf16.mxu0 0
      %863 = vmatpush2.bf16.msra.mxu0 0
      %864 = vmatprep.subr.bf16.mxu0 0
      %865 = vmatpush2.bf16.msra.mxu0 0
      %866 = vmatprep.subr.bf16.mxu0 0
      %867 = vmatpush2.bf16.msra.mxu0 0
      %868 = vmatprep.subr.bf16.mxu0 0
      %869 = vmatpush2.bf16.msra.mxu0 0
      %870 = vmatprep.subr.bf16.mxu0 0
      %871 = vmatpush2.bf16.msra.mxu0 0
      %872 = vmatprep.mubr.bf16.mxu0 0
      %873 = vmatmul.mubr.bf16.gmra.mxu0 %v832
      %v874 = vpop.f32.mrf.mxu0
      %v875 = vadd.f32 %v802, %v874
      %v876 = vpop.f32.mrf.mxu0
      %v877 = vpop.f32.mrf.mxu0
      %v878 = vadd.f32 %v805, %v877
      %v879 = vpop.f32.mrf.mxu0
      %880 = vmatprep.mubr.bf16.mxu0 0
      %881 = vmatmul.mubr.bf16.gmra.mxu0 %v835
      %v882 = vpop.f32.mrf.mxu0
      %v883 = vadd.f32 %v810, %v882
      %v884 = vpop.f32.mrf.mxu0
      %v885 = vpop.f32.mrf.mxu0
      %v886 = vadd.f32 %v813, %v885
      %v887 = vpop.f32.mrf.mxu0
      %888 = vdwg.mxu0
      %v889 = vld [vmem:[%s8] sm:$0x3]
      %vm890 = vcmask 31744
      %v892 = vsel %vm890, %v727, 0
      %v895 = vsel %vm890, %v728, 0
      %vm897 = vcmask 1041408
      %v899 = vsel %vm897, %v889, 0
      %901 = vmatprep.subr.bf16.mxu0 0
      %902 = vmatpush1.bf16.msra.mxu0 0
      %903 = vmatprep.subr.bf16.mxu0 0
      %904 = vmatpush1.bf16.msra.mxu0 0
      %905 = vmatprep.subr.bf16.mxu0 0
      %906 = vmatpush1.bf16.msra.mxu0 0
      %907 = vmatprep.subr.bf16.mxu0 0
      %908 = vmatpush1.bf16.msra.mxu0 0
      %909 = vmatprep.subr.bf16.mxu0 0
      %910 = vmatpush1.bf16.msra.mxu0 0
      %911 = vmatprep.subr.bf16.mxu0 0
      %912 = vmatpush1.bf16.msra.mxu0 0
      %913 = vmatprep.subr.bf16.mxu0 0
      %914 = vmatpush1.bf16.msra.mxu0 0
      %915 = vmatprep.subr.bf16.mxu0 0
      %916 = vmatpush1.bf16.msra.mxu0 %v899
      %917 = vmatprep.subr.bf16.mxu0 0
      %918 = vmatpush2.bf16.msra.mxu0 0
      %919 = vmatprep.subr.bf16.mxu0 0
      %920 = vmatpush2.bf16.msra.mxu0 0
      %921 = vmatprep.subr.bf16.mxu0 0
      %922 = vmatpush2.bf16.msra.mxu0 0
      %923 = vmatprep.subr.bf16.mxu0 0
      %924 = vmatpush2.bf16.msra.mxu0 0
      %925 = vmatprep.subr.bf16.mxu0 0
      %926 = vmatpush2.bf16.msra.mxu0 0
      %927 = vmatprep.subr.bf16.mxu0 0
      %928 = vmatpush2.bf16.msra.mxu0 0
      %929 = vmatprep.subr.bf16.mxu0 0
      %930 = vmatpush2.bf16.msra.mxu0 0
      %931 = vmatprep.subr.bf16.mxu0 0
      %932 = vmatpush2.bf16.msra.mxu0 0
      %933 = vmatprep.mubr.bf16.mxu0 0
      %934 = vmatmul.mubr.bf16.gmra.mxu0 %v892
      %v935 = vpop.f32.mrf.mxu0
      %v936 = vadd.f32 0.0, %v935
      %v937 = vpop.f32.mrf.mxu0
      %v938 = vpop.f32.mrf.mxu0
      %v939 = vadd.f32 0.0, %v938
      %v940 = vpop.f32.mrf.mxu0
      %941 = vmatprep.mubr.bf16.mxu0 0
      %942 = vmatmul.mubr.bf16.gmra.mxu0 %v895
      %v943 = vpop.f32.mrf.mxu0
      %v944 = vadd.f32 0.0, %v943
      %v945 = vpop.f32.mrf.mxu0
      %v946 = vpop.f32.mrf.mxu0
      %v947 = vadd.f32 0.0, %v946
      %v948 = vpop.f32.mrf.mxu0
      %949 = vdwg.mxu0
      %v950 = vadd.f32 %v875, %v936
      %v951 = vadd.f32 %v878, %v939
      %v952 = vadd.f32 %v883, %v944
      %v953 = vadd.f32 %v886, %v947
      %v954 = vmax.f32 %v950, 0.0
      %v955 = vmax.f32 %v951, 0.0
      %v956 = vmax.f32 %v952, 0.0
      %v957 = vmax.f32 %v953, 0.0
      %s958 = scalar_lea.vmem %s6, 20
      %v959 = vld [vmem:[%s958] sm:$0xf]
      %v960 = vld [vmem:[%s958 + $0x4] sm:$0xf]
      %v961 = vld [vmem:[%s958 + $0x8] sm:$0xf]
      %v962 = vld [vmem:[%s958 + $0xc] sm:$0xf]
      %v963 = vld [vmem:[%s958 + $0x10] sm:$0x1]
      %s964 = scalar_lea.vmem %s7, 20
      %v965 = vld [vmem:[%s964] sm:$0xf]
      %v966 = vld [vmem:[%s964 + $0x4] sm:$0xf]
      %v967 = vld [vmem:[%s964 + $0x8] sm:$0xf]
      %v968 = vld [vmem:[%s964 + $0xc] sm:$0xf]
      %v969 = vld [vmem:[%s964 + $0x10] sm:$0x1]
      %v975 = vunpack.c.l.b16 %v965
      %v976 = vunpack.c.l.b16 %v966
      %v977 = vunpack.c.l.b16 %v967
      %v978 = vunpack.c.l.b16 %v968
      %v979 = vunpack.c.l.b16 %v969
      %v980 = vpack.c.b16 %v976, %v975
      %v981 = vpack.c.b16 %v978, %v977
      %v982 = vpack.c.b16 %v979, %v979
      %v986 = vand.u32 %v982, %v763
      %988 = vmatprep.subr.bf16.mxu0 0
      %989 = vmatpush1.bf16.msra.mxu0 0
      %990 = vmatprep.subr.bf16.mxu0 0
      %991 = vmatpush1.bf16.msra.mxu0 0
      %992 = vmatprep.subr.bf16.mxu0 0
      %993 = vmatpush1.bf16.msra.mxu0 0
      %994 = vmatprep.subr.bf16.mxu0 0
      %995 = vmatpush1.bf16.msra.mxu0 0
      %996 = vmatprep.subr.bf16.mxu0 0
      %997 = vmatpush1.bf16.msra.mxu0 0
      %998 = vmatprep.subr.bf16.mxu0 0
      %999 = vmatpush1.bf16.msra.mxu0 %v986
      %1000 = vmatprep.subr.bf16.mxu0 0
      %1001 = vmatpush1.bf16.msra.mxu0 %v981
      %1002 = vmatprep.subr.bf16.mxu0 0
      %1003 = vmatpush1.bf16.msra.mxu0 %v980
      %1004 = vmatprep.subr.bf16.mxu0 0
      %1005 = vmatpush2.bf16.msra.mxu0 0
      %1006 = vmatprep.subr.bf16.mxu0 0
      %1007 = vmatpush2.bf16.msra.mxu0 0
      %1008 = vmatprep.subr.bf16.mxu0 0
      %1009 = vmatpush2.bf16.msra.mxu0 0
      %1010 = vmatprep.subr.bf16.mxu0 0
      %1011 = vmatpush2.bf16.msra.mxu0 0
      %1012 = vmatprep.subr.bf16.mxu0 0
      %1013 = vmatpush2.bf16.msra.mxu0 0
      %1014 = vmatprep.subr.bf16.mxu0 0
      %1015 = vmatpush2.bf16.msra.mxu0 0
      %1016 = vmatprep.subr.bf16.mxu0 0
      %1017 = vmatpush2.bf16.msra.mxu0 0
      %1018 = vmatprep.subr.bf16.mxu0 0
      %1019 = vmatpush2.bf16.msra.mxu0 0
      %1020 = vmatprep.mubr.bf16.mxu0 0
      %1021 = vmatmul.mubr.bf16.gmra.mxu0 %v756
      %v1022 = vpop.f32.mrf.mxu0
      %v1023 = vadd.f32 0.0, %v1022
      %v1024 = vpop.f32.mrf.mxu0
      %v1025 = vpop.f32.mrf.mxu0
      %v1026 = vadd.f32 0.0, %v1025
      %v1027 = vpop.f32.mrf.mxu0
      %1028 = vmatprep.mubr.bf16.mxu0 0
      %1029 = vmatmul.mubr.bf16.gmra.mxu0 %v759
      %v1030 = vpop.f32.mrf.mxu0
      %v1031 = vadd.f32 0.0, %v1030
      %v1032 = vpop.f32.mrf.mxu0
      %v1033 = vpop.f32.mrf.mxu0
      %v1034 = vadd.f32 0.0, %v1033
      %v1035 = vpop.f32.mrf.mxu0
      %1036 = vdwg.mxu0
      %v1042 = vunpack.c.l.b16 %v959
      %v1043 = vunpack.c.l.b16 %v960
      %v1044 = vunpack.c.l.b16 %v961
      %v1045 = vunpack.c.l.b16 %v962
      %v1046 = vunpack.c.l.b16 %v963
      %v1047 = vpack.c.b16 %v1043, %v1042
      %v1048 = vpack.c.b16 %v1045, %v1044
      %v1049 = vpack.c.b16 %v1046, %v1046
      %v1053 = vand.u32 %v1049, %v763
      %1055 = vmatprep.subr.bf16.mxu0 0
      %1056 = vmatpush1.bf16.msra.mxu0 0
      %1057 = vmatprep.subr.bf16.mxu0 0
      %1058 = vmatpush1.bf16.msra.mxu0 0
      %1059 = vmatprep.subr.bf16.mxu0 0
      %1060 = vmatpush1.bf16.msra.mxu0 0
      %1061 = vmatprep.subr.bf16.mxu0 0
      %1062 = vmatpush1.bf16.msra.mxu0 0
      %1063 = vmatprep.subr.bf16.mxu0 0
      %1064 = vmatpush1.bf16.msra.mxu0 0
      %1065 = vmatprep.subr.bf16.mxu0 0
      %1066 = vmatpush1.bf16.msra.mxu0 %v1053
      %1067 = vmatprep.subr.bf16.mxu0 0
      %1068 = vmatpush1.bf16.msra.mxu0 %v1048
      %1069 = vmatprep.subr.bf16.mxu0 0
      %1070 = vmatpush1.bf16.msra.mxu0 %v1047
      %1071 = vmatprep.subr.bf16.mxu0 0
      %1072 = vmatpush2.bf16.msra.mxu0 0
      %1073 = vmatprep.subr.bf16.mxu0 0
      %1074 = vmatpush2.bf16.msra.mxu0 0
      %1075 = vmatprep.subr.bf16.mxu0 0
      %1076 = vmatpush2.bf16.msra.mxu0 0
      %1077 = vmatprep.subr.bf16.mxu0 0
      %1078 = vmatpush2.bf16.msra.mxu0 0
      %1079 = vmatprep.subr.bf16.mxu0 0
      %1080 = vmatpush2.bf16.msra.mxu0 0
      %1081 = vmatprep.subr.bf16.mxu0 0
      %1082 = vmatpush2.bf16.msra.mxu0 0
      %1083 = vmatprep.subr.bf16.mxu0 0
      %1084 = vmatpush2.bf16.msra.mxu0 0
      %1085 = vmatprep.subr.bf16.mxu0 0
      %1086 = vmatpush2.bf16.msra.mxu0 0
      %1087 = vmatprep.mubr.bf16.mxu0 0
      %1088 = vmatmul.mubr.bf16.gmra.mxu0 %v832
      %v1089 = vpop.f32.mrf.mxu0
      %v1090 = vadd.f32 %v1023, %v1089
      %v1091 = vpop.f32.mrf.mxu0
      %v1092 = vpop.f32.mrf.mxu0
      %v1093 = vadd.f32 %v1026, %v1092
      %v1094 = vpop.f32.mrf.mxu0
      %1095 = vmatprep.mubr.bf16.mxu0 0
      %1096 = vmatmul.mubr.bf16.gmra.mxu0 %v835
      %v1097 = vpop.f32.mrf.mxu0
      %v1098 = vadd.f32 %v1031, %v1097
      %v1099 = vpop.f32.mrf.mxu0
      %v1100 = vpop.f32.mrf.mxu0
      %v1101 = vadd.f32 %v1034, %v1100
      %v1102 = vpop.f32.mrf.mxu0
      %1103 = vdwg.mxu0
      %v1104 = vpack.c.bf16 %v955, %v954
      %v1105 = vpack.c.bf16 %v957, %v956
      %v1106 = vld [vmem:[%s9] sm:$0xf]
      %vm1107 = vcmask 64512
      %v1109 = vsel %vm1107, %v1104, 0
      %v1112 = vsel %vm1107, %v1105, 0
      %vm1114 = vcmask 1043456
      %v1116 = vsel %vm1114, %v1106, 0
      %1118 = vmatprep.subr.bf16.mxu0 0
      %1119 = vmatpush1.bf16.msra.mxu0 0
      %1120 = vmatprep.subr.bf16.mxu0 0
      %1121 = vmatpush1.bf16.msra.mxu0 0
      %1122 = vmatprep.subr.bf16.mxu0 0
      %1123 = vmatpush1.bf16.msra.mxu0 0
      %1124 = vmatprep.subr.bf16.mxu0 0
      %1125 = vmatpush1.bf16.msra.mxu0 0
      %1126 = vmatprep.subr.bf16.mxu0 0
      %1127 = vmatpush1.bf16.msra.mxu0 0
      %1128 = vmatprep.subr.bf16.mxu0 0
      %1129 = vmatpush1.bf16.msra.mxu0 0
      %1130 = vmatprep.subr.bf16.mxu0 0
      %1131 = vmatpush1.bf16.msra.mxu0 0
      %1132 = vmatprep.subr.bf16.mxu0 0
      %1133 = vmatpush1.bf16.msra.mxu0 %v1116
      %1134 = vmatprep.subr.bf16.mxu0 0
      %1135 = vmatpush2.bf16.msra.mxu0 0
      %1136 = vmatprep.subr.bf16.mxu0 0
      %1137 = vmatpush2.bf16.msra.mxu0 0
      %1138 = vmatprep.subr.bf16.mxu0 0
      %1139 = vmatpush2.bf16.msra.mxu0 0
      %1140 = vmatprep.subr.bf16.mxu0 0
      %1141 = vmatpush2.bf16.msra.mxu0 0
      %1142 = vmatprep.subr.bf16.mxu0 0
      %1143 = vmatpush2.bf16.msra.mxu0 0
      %1144 = vmatprep.subr.bf16.mxu0 0
      %1145 = vmatpush2.bf16.msra.mxu0 0
      %1146 = vmatprep.subr.bf16.mxu0 0
      %1147 = vmatpush2.bf16.msra.mxu0 0
      %1148 = vmatprep.subr.bf16.mxu0 0
      %1149 = vmatpush2.bf16.msra.mxu0 0
      %1150 = vmatprep.mubr.bf16.mxu0 0
      %1151 = vmatmul.mubr.bf16.gmra.mxu0 %v1109
      %v1152 = vpop.f32.mrf.mxu0
      %v1153 = vadd.f32 0.0, %v1152
      %v1154 = vpop.f32.mrf.mxu0
      %v1155 = vpop.f32.mrf.mxu0
      %v1156 = vadd.f32 0.0, %v1155
      %v1157 = vpop.f32.mrf.mxu0
      %1158 = vmatprep.mubr.bf16.mxu0 0
      %1159 = vmatmul.mubr.bf16.gmra.mxu0 %v1112
      %v1160 = vpop.f32.mrf.mxu0
      %v1161 = vadd.f32 0.0, %v1160
      %v1162 = vpop.f32.mrf.mxu0
      %v1163 = vpop.f32.mrf.mxu0
      %v1164 = vadd.f32 0.0, %v1163
      %v1165 = vpop.f32.mrf.mxu0
      %1166 = vdwg.mxu0
      %v1167 = vadd.f32 %v1090, %v1153
      %v1168 = vadd.f32 %v1093, %v1156
      %v1169 = vadd.f32 %v1098, %v1161
      %v1170 = vadd.f32 %v1101, %v1164
      %v1171 = vmax.f32 %v1167, 0.0
      %v1172 = vmax.f32 %v1168, 0.0
      %v1173 = vmax.f32 %v1169, 0.0
      %v1174 = vmax.f32 %v1170, 0.0
      %v1175 = vpack.c.bf16 %v1172, %v1171
      %v1176 = vpack.c.bf16 %v1174, %v1173
      %v1177 = vld [vmem:[%s10] sm:$0xf]
      %v1178 = vld [vmem:[%s11] sm:$0x3]
      %v1180 = vsel %vm897, %v1178, 0
      %1182 = vmatprep.subr.bf16.mxu0 0
      %1183 = vmatpush1.bf16.msra.mxu0 0
      %1184 = vmatprep.subr.bf16.mxu0 0
      %1185 = vmatpush1.bf16.msra.mxu0 0
      %1186 = vmatprep.subr.bf16.mxu0 0
      %1187 = vmatpush1.bf16.msra.mxu0 0
      %1188 = vmatprep.subr.bf16.mxu0 0
      %1189 = vmatpush1.bf16.msra.mxu0 0
      %1190 = vmatprep.subr.bf16.mxu0 0
      %1191 = vmatpush1.bf16.msra.mxu0 0
      %1192 = vmatprep.subr.bf16.mxu0 0
      %1193 = vmatpush1.bf16.msra.mxu0 0
      %1194 = vmatprep.subr.bf16.mxu0 0
      %1195 = vmatpush1.bf16.msra.mxu0 0
      %1196 = vmatprep.subr.bf16.mxu0 0
      %1197 = vmatpush1.bf16.msra.mxu0 %v1180
      %1198 = vmatprep.subr.bf16.mxu0 0
      %1199 = vmatpush2.bf16.msra.mxu0 0
      %1200 = vmatprep.subr.bf16.mxu0 0
      %1201 = vmatpush2.bf16.msra.mxu0 0
      %1202 = vmatprep.subr.bf16.mxu0 0
      %1203 = vmatpush2.bf16.msra.mxu0 0
      %1204 = vmatprep.subr.bf16.mxu0 0
      %1205 = vmatpush2.bf16.msra.mxu0 0
      %1206 = vmatprep.subr.bf16.mxu0 0
      %1207 = vmatpush2.bf16.msra.mxu0 0
      %1208 = vmatprep.subr.bf16.mxu0 0
      %1209 = vmatpush2.bf16.msra.mxu0 0
      %1210 = vmatprep.subr.bf16.mxu0 0
      %1211 = vmatpush2.bf16.msra.mxu0 0
      %1212 = vmatprep.subr.bf16.mxu0 0
      %1213 = vmatpush2.bf16.msra.mxu0 0
      %1214 = vmatprep.mubr.bf16.mxu0 0
      %1215 = vmatmul.mubr.bf16.gmra.mxu0 %v892
      %v1216 = vpop.f32.mrf.mxu0
      %v1217 = vadd.f32 0.0, %v1216
      %v1218 = vpop.f32.mrf.mxu0
      %v1219 = vpop.f32.mrf.mxu0
      %v1220 = vadd.f32 0.0, %v1219
      %v1221 = vpop.f32.mrf.mxu0
      %1222 = vmatprep.mubr.bf16.mxu0 0
      %1223 = vmatmul.mubr.bf16.gmra.mxu0 %v895
      %v1224 = vpop.f32.mrf.mxu0
      %v1225 = vadd.f32 0.0, %v1224
      %v1226 = vpop.f32.mrf.mxu0
      %v1227 = vpop.f32.mrf.mxu0
      %v1228 = vadd.f32 0.0, %v1227
      %v1229 = vpop.f32.mrf.mxu0
      %1230 = vdwg.mxu0
      %v1232 = vsel %vm1107, %v1175, 0
      %v1235 = vsel %vm1107, %v1176, 0
      %v1238 = vsel %vm1114, %v1177, 0
      %1240 = vmatprep.subr.bf16.mxu0 0
      %1241 = vmatpush1.bf16.msra.mxu0 0
      %1242 = vmatprep.subr.bf16.mxu0 0
      %1243 = vmatpush1.bf16.msra.mxu0 0
      %1244 = vmatprep.subr.bf16.mxu0 0
      %1245 = vmatpush1.bf16.msra.mxu0 0
      %1246 = vmatprep.subr.bf16.mxu0 0
      %1247 = vmatpush1.bf16.msra.mxu0 0
      %1248 = vmatprep.subr.bf16.mxu0 0
      %1249 = vmatpush1.bf16.msra.mxu0 0
      %1250 = vmatprep.subr.bf16.mxu0 0
      %1251 = vmatpush1.bf16.msra.mxu0 0
      %1252 = vmatprep.subr.bf16.mxu0 0
      %1253 = vmatpush1.bf16.msra.mxu0 0
      %1254 = vmatprep.subr.bf16.mxu0 0
      %1255 = vmatpush1.bf16.msra.mxu0 %v1238
      %1256 = vmatprep.subr.bf16.mxu0 0
      %1257 = vmatpush2.bf16.msra.mxu0 0
      %1258 = vmatprep.subr.bf16.mxu0 0
      %1259 = vmatpush2.bf16.msra.mxu0 0
      %1260 = vmatprep.subr.bf16.mxu0 0
      %1261 = vmatpush2.bf16.msra.mxu0 0
      %1262 = vmatprep.subr.bf16.mxu0 0
      %1263 = vmatpush2.bf16.msra.mxu0 0
      %1264 = vmatprep.subr.bf16.mxu0 0
      %1265 = vmatpush2.bf16.msra.mxu0 0
      %1266 = vmatprep.subr.bf16.mxu0 0
      %1267 = vmatpush2.bf16.msra.mxu0 0
      %1268 = vmatprep.subr.bf16.mxu0 0
      %1269 = vmatpush2.bf16.msra.mxu0 0
      %1270 = vmatprep.subr.bf16.mxu0 0
      %1271 = vmatpush2.bf16.msra.mxu0 0
      %1272 = vmatprep.mubr.bf16.mxu0 0
      %1273 = vmatmul.mubr.bf16.gmra.mxu0 %v1232
      %v1274 = vpop.f32.mrf.mxu0
      %v1275 = vadd.f32 %v1217, %v1274
      %v1276 = vpop.f32.mrf.mxu0
      %v1277 = vpop.f32.mrf.mxu0
      %v1278 = vadd.f32 %v1220, %v1277
      %v1279 = vpop.f32.mrf.mxu0
      %1280 = vmatprep.mubr.bf16.mxu0 0
      %1281 = vmatmul.mubr.bf16.gmra.mxu0 %v1235
      %v1282 = vpop.f32.mrf.mxu0
      %v1283 = vadd.f32 %v1225, %v1282
      %v1284 = vpop.f32.mrf.mxu0
      %v1285 = vpop.f32.mrf.mxu0
      %v1286 = vadd.f32 %v1228, %v1285
      %v1287 = vpop.f32.mrf.mxu0
      %1288 = vdwg.mxu0
      %v1289 = vmax.f32 %v1275, 0.0
      %v1290 = vmax.f32 %v1278, 0.0
      %v1291 = vmax.f32 %v1283, 0.0
      %v1292 = vmax.f32 %v1286, 0.0
      %v1293 = vpack.c.bf16 %v1290, %v1289
      %v1294 = vpack.c.bf16 %v1292, %v1291
      %1297 = vxpose.xlu0.c.b16.start [1/8] %v666, 128
      %1298 = vxpose.xlu0.c.b16.cont [2/8] %v667, 128
      %1299 = vxpose.xlu0.c.b16.cont [3/8] 0, 128
      %1300 = vxpose.xlu0.c.b16.cont [4/8] 0, 128
      %1301 = vxpose.xlu0.c.b16.cont [5/8] 0, 128
      %1302 = vxpose.xlu0.c.b16.cont [6/8] 0, 128
      %1303 = vxpose.xlu0.c.b16.cont [7/8] 0, 128
      %1304 = vxpose.xlu0.c.b16.end [8/8] 0, 128
      %v1305 = vpop.trf.xlu0
      %v1306 = vpop.trf.xlu0
      %v1307 = vpop.trf.xlu0
      %v1308 = vpop.trf.xlu0
      %v1309 = vpop.trf.xlu0
      %v1310 = vpop.trf.xlu0
      %v1311 = vpop.trf.xlu0
      %v1312 = vpop.trf.xlu0
      %vm1313 = vcmask 261120
      %v1315 = vsel %vm1313, %v1305, 0
      %1317 = vmatprep.subr.bf16.mxu0 0
      %1318 = vmatpush1.bf16.msra.mxu0 0
      %1319 = vmatprep.subr.bf16.mxu0 0
      %1320 = vmatpush1.bf16.msra.mxu0 0
      %1321 = vmatprep.subr.bf16.mxu0 0
      %1322 = vmatpush1.bf16.msra.mxu0 0
      %1323 = vmatprep.subr.bf16.mxu0 0
      %1324 = vmatpush1.bf16.msra.mxu0 0
      %1325 = vmatprep.subr.bf16.mxu0 0
      %1326 = vmatpush1.bf16.msra.mxu0 0
      %1327 = vmatprep.subr.bf16.mxu0 0
      %1328 = vmatpush1.bf16.msra.mxu0 0
      %1329 = vmatprep.subr.bf16.mxu0 0
      %1330 = vmatpush1.bf16.msra.mxu0 %v1294
      %1331 = vmatprep.subr.bf16.mxu0 0
      %1332 = vmatpush1.bf16.msra.mxu0 %v1293
      %1333 = vmatprep.subr.bf16.mxu0 0
      %1334 = vmatpush2.bf16.msra.mxu0 0
      %1335 = vmatprep.subr.bf16.mxu0 0
      %1336 = vmatpush2.bf16.msra.mxu0 0
      %1337 = vmatprep.subr.bf16.mxu0 0
      %1338 = vmatpush2.bf16.msra.mxu0 0
      %1339 = vmatprep.subr.bf16.mxu0 0
      %1340 = vmatpush2.bf16.msra.mxu0 0
      %1341 = vmatprep.subr.bf16.mxu0 0
      %1342 = vmatpush2.bf16.msra.mxu0 0
      %1343 = vmatprep.subr.bf16.mxu0 0
      %1344 = vmatpush2.bf16.msra.mxu0 0
      %1345 = vmatprep.subr.bf16.mxu0 0
      %1346 = vmatpush2.bf16.msra.mxu0 0
      %1347 = vmatprep.subr.bf16.mxu0 0
      %1348 = vmatpush2.bf16.msra.mxu0 0
      %1349 = vmatprep.mubr.bf16.mxu0 0
      %1350 = vmatmul.mubr.bf16.gmra.mxu0 %v1315
      %v1351 = vpop.f32.mrf.mxu0
      %v1352 = vadd.f32 0.0, %v1351
      %v1353 = vpop.f32.mrf.mxu0
      %v1354 = vpop.f32.mrf.mxu0
      %v1355 = vadd.f32 0.0, %v1354
      %v1356 = vpop.f32.mrf.mxu0
      %1357 = vdwg.mxu0
      %v1358 = vpack.c.bf16 %v1355, %v1352
      %v1359 = vld [vmem:[%s12] sm:$0xf]
      %v1360 = vld [vmem:[%s12 + $0x4] sm:$0xf]
      %v1361 = vld [vmem:[%s12 + $0x8] sm:$0xf]
      %v1362 = vld [vmem:[%s12 + $0xc] sm:$0xf]
      %v1363 = vld [vmem:[%s13] sm:$0x1]
      %1364 = vset.pattern.permute.xlu0 0
      %1365 = vperm.xlu0 %1364, %v564
      %v1366 = vpop.permute.xlu0 %1365
      %1368 = vset.pattern.permute.xlu0 0
      %1369 = vperm.xlu0 %1368, %v565
      %v1370 = vpop.permute.xlu0 %1369
      %v1373 = vlaneseq
      %v1374 = vshrl.u32 %v1373, 7
      %v1375 = vsub.s32 0, %v1374
      %v1376 = vrot.slane %v1363, %v1375
      %v1378 = vmul.f32 %v1366, %v1376
      %v1379 = vmul.f32 %v1370, %v1376
      %v1384 = vunpack.c.l.b16 %v1359
      %v1385 = vunpack.c.l.b16 %v1360
      %v1386 = vunpack.c.l.b16 %v1361
      %v1387 = vunpack.c.l.b16 %v1362
      %v1388 = vpack.c.b16 %v1385, %v1384
      %v1389 = vpack.c.b16 %v1387, %v1386
      %v1393 = vsel %vm1313, %v1358, 0
      %1395 = vmatprep.subr.bf16.mxu0 0
      %1396 = vmatpush1.bf16.msra.mxu0 0
      %1397 = vmatprep.subr.bf16.mxu0 0
      %1398 = vmatpush1.bf16.msra.mxu0 0
      %1399 = vmatprep.subr.bf16.mxu0 0
      %1400 = vmatpush1.bf16.msra.mxu0 0
      %1401 = vmatprep.subr.bf16.mxu0 0
      %1402 = vmatpush1.bf16.msra.mxu0 0
      %1403 = vmatprep.subr.bf16.mxu0 0
      %1404 = vmatpush1.bf16.msra.mxu0 0
      %1405 = vmatprep.subr.bf16.mxu0 0
      %1406 = vmatpush1.bf16.msra.mxu0 0
      %1407 = vmatprep.subr.bf16.mxu0 0
      %1408 = vmatpush1.bf16.msra.mxu0 %v1389
      %1409 = vmatprep.subr.bf16.mxu0 0
      %1410 = vmatpush1.bf16.msra.mxu0 %v1388
      %1411 = vmatprep.subr.bf16.mxu0 0
      %1412 = vmatpush2.bf16.msra.mxu0 0
      %1413 = vmatprep.subr.bf16.mxu0 0
      %1414 = vmatpush2.bf16.msra.mxu0 0
      %1415 = vmatprep.subr.bf16.mxu0 0
      %1416 = vmatpush2.bf16.msra.mxu0 0
      %1417 = vmatprep.subr.bf16.mxu0 0
      %1418 = vmatpush2.bf16.msra.mxu0 0
      %1419 = vmatprep.subr.bf16.mxu0 0
      %1420 = vmatpush2.bf16.msra.mxu0 0
      %1421 = vmatprep.subr.bf16.mxu0 0
      %1422 = vmatpush2.bf16.msra.mxu0 0
      %1423 = vmatprep.subr.bf16.mxu0 0
      %1424 = vmatpush2.bf16.msra.mxu0 0
      %1425 = vmatprep.subr.bf16.mxu0 0
      %1426 = vmatpush2.bf16.msra.mxu0 0
      %1427 = vmatprep.mubr.bf16.mxu0 0
      %1428 = vmatmul.mubr.bf16.gmra.mxu0 %v1393
      %v1429 = vpop.f32.mrf.mxu0
      %v1430 = vadd.f32 %v1378, %v1429
      %v1431 = vpop.f32.mrf.mxu0
      %v1432 = vpop.f32.mrf.mxu0
      %v1433 = vadd.f32 %v1379, %v1432
      %v1434 = vpop.f32.mrf.mxu0
      %1435 = vdwg.mxu0
      %v1436 = vtanh.pop %v1430
      %v1437 = vtanh.pop %v1433
      %1438 = vst.msk [vmem:[#allocation2] sm:$0xff] %vm1313, %v1436
      %1439 = vst.msk [vmem:[#allocation2 + $0x8] sm:$0xff] %vm1313, %v1437
      %v1440 = vpack.c.bf16 %v1437, %v1436
      %v1441 = vld [vmem:[%s14] sm:$0xf]
      %v1442 = vld [vmem:[%s14 + $0x4] sm:$0xf]
      %v1443 = vld [vmem:[%s14 + $0x8] sm:$0xf]
      %v1444 = vld [vmem:[%s14 + $0xc] sm:$0xf]
      %v1449 = vunpack.c.l.b16 %v1441
      %v1450 = vunpack.c.l.b16 %v1442
      %v1451 = vunpack.c.l.b16 %v1443
      %v1452 = vunpack.c.l.b16 %v1444
      %v1453 = vpack.c.b16 %v1450, %v1449
      %v1454 = vpack.c.b16 %v1452, %v1451
      %v1458 = vsel %vm1313, %v1440, 0
      %1460 = vmatprep.subr.bf16.mxu0 0
      %1461 = vmatpush1.bf16.msra.mxu0 0
      %1462 = vmatprep.subr.bf16.mxu0 0
      %1463 = vmatpush1.bf16.msra.mxu0 0
      %1464 = vmatprep.subr.bf16.mxu0 0
      %1465 = vmatpush1.bf16.msra.mxu0 0
      %1466 = vmatprep.subr.bf16.mxu0 0
      %1467 = vmatpush1.bf16.msra.mxu0 0
      %1468 = vmatprep.subr.bf16.mxu0 0
      %1469 = vmatpush1.bf16.msra.mxu0 0
      %1470 = vmatprep.subr.bf16.mxu0 0
      %1471 = vmatpush1.bf16.msra.mxu0 0
      %1472 = vmatprep.subr.bf16.mxu0 0
      %1473 = vmatpush1.bf16.msra.mxu0 %v1454
      %1474 = vmatprep.subr.bf16.mxu0 0
      %1475 = vmatpush1.bf16.msra.mxu0 %v1453
      %1476 = vmatprep.subr.bf16.mxu0 0
      %1477 = vmatpush2.bf16.msra.mxu0 0
      %1478 = vmatprep.subr.bf16.mxu0 0
      %1479 = vmatpush2.bf16.msra.mxu0 0
      %1480 = vmatprep.subr.bf16.mxu0 0
      %1481 = vmatpush2.bf16.msra.mxu0 0
      %1482 = vmatprep.subr.bf16.mxu0 0
      %1483 = vmatpush2.bf16.msra.mxu0 0
      %1484 = vmatprep.subr.bf16.mxu0 0
      %1485 = vmatpush2.bf16.msra.mxu0 0
      %1486 = vmatprep.subr.bf16.mxu0 0
      %1487 = vmatpush2.bf16.msra.mxu0 0
      %1488 = vmatprep.subr.bf16.mxu0 0
      %1489 = vmatpush2.bf16.msra.mxu0 0
      %1490 = vmatprep.subr.bf16.mxu0 0
      %1491 = vmatpush2.bf16.msra.mxu0 0
      %1492 = vmatprep.mubr.bf16.mxu0 0
      %1493 = vmatmul.mubr.bf16.gmra.mxu0 %v1458
      %v1494 = vpop.f32.mrf.mxu0
      %v1495 = vadd.f32 0.0, %v1494
      %v1496 = vpop.f32.mrf.mxu0
      %v1497 = vpop.f32.mrf.mxu0
      %v1498 = vadd.f32 0.0, %v1497
      %v1499 = vpop.f32.mrf.mxu0
      %1500 = vdwg.mxu0
      %v1501 = vlaneseq
      %v1502 = vand.u32 %v1501, 127
      %v1503 = vstv %s26
      %vm1504 = vcmp.eq.s32.totalorder %v1502, %v1503
      %1506 = vset.pattern.permute.xlu0 0
      %1507 = vperm.xlu0 %1506, %v1495
      %v1508 = vpop.permute.xlu0 %1507
      %1511 = vset.pattern.permute.xlu0 0
      %1512 = vperm.xlu0 %1511, %v1498
      %v1513 = vpop.permute.xlu0 %1512
      %v1515 = vld [vmem:[%s15] sm:$0xff]
      %v1516 = vld [vmem:[%s15 + $0x8] sm:$0xff]
      %v1517 = vsel %vm1504, %v1508, %v1515
      %v1518 = vsel %vm1504, %v1513, %v1516
      %1519 = vst.msk [vmem:[%s15] sm:$0xff] %vm890, %v1517
      %1520 = vst.msk [vmem:[%s15 + $0x8] sm:$0xff] %vm890, %v1518
      // Predicated region
      $region85: #{tpu_custom_call.1} parent=79 // pred_check
        %p1521 = pneg %p364
      $region86: #{tpu_custom_call.1} parent=79 // pred_check_branch
        %1523 = sbr.rel (%p1521) target = $region88
      $region87: #{tpu_custom_call.1} parent=79 // pred_region
        _
      $region88: #{tpu_custom_call.1} parent=79 // pred_fallthru
        _
      // Predicated region
      $region89: #{tpu_custom_call.1} parent=79 // pred_check
        %p1524 = pneg %p364
      $region90: #{tpu_custom_call.1} parent=79 // pred_check_branch
        %1526 = sbr.rel (%p1524) target = $region92
      $region91: #{tpu_custom_call.1} parent=79 // pred_region
        _
      $region92: #{tpu_custom_call.1} parent=79 // pred_fallthru
        _
    $region80: #{tpu_custom_call.1} parent=5 // pred_fallthru
      _
    %p1527 = scmp.le.s32.totalorder 2, %s21
    // Predicated region
    $region93: #{tpu_custom_call.1} parent=5 // pred_check
      %p1528 = pneg %p1527
    $region94: #{tpu_custom_call.1} parent=5 // pred_check_branch
      %1530 = sbr.rel (%p1528) target = $region96
    $region95: #{tpu_custom_call.1} parent=5 // pred_region
      %s1531 = ssub.s32 %s21, 2
    $region96: #{tpu_custom_call.1} parent=5 // pred_fallthru
      _
  $region6: #{tpu_custom_call.1} parent=0 // loop_footer
    %s25 = sadd.s32 1, %s21
  $region7: #{tpu_custom_call.1} parent=0 // loop_footer_branch
    %20 = sbr.rel target = $region3
  $region8: #{tpu_custom_call.1} parent=0 // loop_exit
    _

</llo_original>
